<compile_context>
chip_gen: v6e
topology: v6e:2x2x1
jax: 0.10.0
libtpu: 0.0.40
codegen_flags: <defaults>
</compile_context>

<pallas_src>
import math

import jax
import jax.numpy as jnp
from jax.experimental import pallas as pl
from jax.experimental.pallas import tpu as pltpu


def _round_up(x, m):
    return ((x + m - 1) // m) * m


def _default_num_tiles(batch, max_tile_rows):
    """1 tile on single-TC parts (v5e/v6e), 2 balanced tiles on v7x megacore,
    and more tiles only when the batch exceeds max_tile_rows per tile."""
    try:
        kind = jax.devices()[0].device_kind.lower()
    except Exception:  # pragma: no cover - defensive
        kind = ""
    cores = 2 if "v7" in kind else 1
    return max(cores, pl.cdiv(batch, max_tile_rows))


def actor_kernel(x_ref, w1_ref, b1_ref, w2_ref, w3_ref, out_ref):
    """Fused 3-layer MLP for one batch tile.

    h1 = relu(x @ W1 + b1)        # x = concat(goal, state) in bf16
    h2 = relu(h1 @ W2)
    out = tanh(h2 @ W3_pad)       # W3 zero-padded to a 128-lane multiple
    """
    h1 = (jnp.dot(x_ref[...], w1_ref[...], preferred_element_type=jnp.float32)
          + b1_ref[...])
    h1 = jnp.maximum(h1, 0.0).astype(jnp.bfloat16)

    h2 = jnp.dot(h1, w2_ref[...], preferred_element_type=jnp.float32)
    h2 = jnp.maximum(h2, 0.0).astype(jnp.bfloat16)

    h3 = jnp.dot(h2, w3_ref[...], preferred_element_type=jnp.float32)
    out_ref[...] = jnp.tanh(h3).astype(out_ref.dtype)


def actor_forward(goal, state, params, action_size, *,
                  num_batch_tiles=None, max_tile_rows=2048):
    """goal: (B, her_feats) f32, state: (B, state_size) f32 -> (B, action_size) f32."""
    w1, b1, w2, w3 = params
    in_dim = w1.shape[0]
    fc1_p = w1.shape[1]
    fc2_p = w2.shape[1]
    out_p = w3.shape[1]

    # Wrapper-side concat + bf16 cast (fuses into the surrounding XLA graph;
    # one K=32 MXU push in the kernel instead of two tiny ones).
    x = jnp.concatenate([goal, state], axis=-1).astype(jnp.bfloat16)
    b = x.shape[0]
    assert x.shape[1] == in_dim

    # Batch tiling: as few tiles as the hardware wants, rows padded only to a
    # multiple of 16 (bf16 sublane pack), not to a fixed 256.
    if num_batch_tiles is None:
        num_batch_tiles = _default_num_tiles(b, max_tile_rows)
    tile_m = _round_up(pl.cdiv(b, num_batch_tiles), 16)
    b_pad = num_batch_tiles * tile_m
    if b_pad != b:
        x = jnp.pad(x, ((0, b_pad - b), (0, 0)))

    flops = 2 * b_pad * (in_dim * fc1_p + fc1_p * fc2_p + fc2_p * out_p)
    bytes_accessed = (2 * (in_dim * fc1_p + fc1_p * fc2_p + fc2_p * out_p)  # bf16 weights
                      + 4 * fc1_p                                           # f32 bias
                      + 2 * b_pad * in_dim                                  # bf16 input
                      + 2 * b_pad * out_p)                                  # bf16 output

    out = pl.pallas_call(
        actor_kernel,
        out_shape=jax.ShapeDtypeStruct((b_pad, out_p), jnp.bfloat16),
        grid_spec=pl.GridSpec(
            grid=(num_batch_tiles,),
            in_specs=[
                pl.BlockSpec((tile_m, in_dim), lambda i: (i, 0)),  # x tile
                pl.BlockSpec((in_dim, fc1_p), lambda i: (0, 0)),   # W1, resident
                pl.BlockSpec((1, fc1_p), lambda i: (0, 0)),        # b1, resident
                pl.BlockSpec((fc1_p, fc2_p), lambda i: (0, 0)),    # W2, resident
                pl.BlockSpec((fc2_p, out_p), lambda i: (0, 0)),    # W3, resident
            ],
            out_specs=pl.BlockSpec((tile_m, out_p), lambda i: (i, 0)),
        ),
        compiler_params=pltpu.CompilerParams(
            dimension_semantics=("parallel",),  # independent batch tiles -> megacore
        ),
        cost_estimate=pl.CostEstimate(
            flops=flops,
            transcendentals=b_pad * out_p,      # tanh
            bytes_accessed=bytes_accessed,
        ),
    )(x, w1, b1, w2, w3)

    return out[:b, :action_size].astype(jnp.float32)


def init_actor_params(key, state_size, her_state_features, action_size,
                      fc1_units, fc2_units):
    """Deterministic init mimicking Actor.reset_parameters().

    hidden_init() uses weight.size()[0] (== out_features for nn.Linear), so
    lim = 1/sqrt(out_features); fc1's bias keeps PyTorch's default Linear bias
    init uniform(-1/sqrt(in_features), 1/sqrt(in_features)).

    fc1/fc2/action dims are zero-padded to 128-lane multiples so all kernel
    activations are lane-dense; zero padding is exact (relu(0)=0, tanh(0)=0).
    """
    in_dim = state_size + her_state_features
    k1, k2, k3, k4 = jax.random.split(key, 4)

    lim1 = 1.0 / math.sqrt(fc1_units)          # hidden_init(fc1)
    lim2 = 1.0 / math.sqrt(fc2_units)          # hidden_init(fc2)
    lim3 = 0.003
    blim = 1.0 / math.sqrt(in_dim)             # default Linear bias init

    fc1_p = _round_up(fc1_units, 128)
    fc2_p = _round_up(fc2_units, 128)
    out_p = _round_up(action_size, 128)

    # Stored as (in, out) = W^T so the kernel does row-major x @ W on the MXU.
    w1_t = jax.random.uniform(k1, (in_dim, fc1_units), jnp.float32, -lim1, lim1)
    b1 = jax.random.uniform(k4, (1, fc1_units), jnp.float32, -blim, blim)
    w2_t = jax.random.uniform(k2, (fc1_units, fc2_units), jnp.float32, -lim2, lim2)
    w3_t = jax.random.uniform(k3, (fc2_units, action_size), jnp.float32, -lim3, lim3)

    w1_pad = jnp.zeros((in_dim, fc1_p), jnp.float32).at[:, :fc1_units].set(w1_t)
    b1_pad = jnp.zeros((1, fc1_p), jnp.float32).at[:, :fc1_units].set(b1)
    w2_pad = jnp.zeros((fc1_p, fc2_p), jnp.float32).at[:fc1_units, :fc2_units].set(w2_t)
    w3_pad = jnp.zeros((fc2_p, out_p), jnp.float32).at[:fc2_units, :action_size].set(w3_t)

    # bf16 weights (halves DMA bytes, MXU-native); bias stays f32 (f32 add path).
    bf16 = lambda a: a.astype(jnp.bfloat16)
    return (bf16(w1_pad), b1_pad, bf16(w2_pad), bf16(w3_pad))


if __name__ == "__main__":
    # Small shapes consistent with the module's forward; batch chosen so the
    # tile selection + batch-padding path is exercised (300 -> 304 on 1-TC,
    # 2 x 160 on v7x).
    BATCH = 300
    HER_FEATS = 8            # cfg['her_state_features'] -> goal features
    STATE_SIZE = 24          # raw state features (concat -> 32 inputs to fc1)
    ACTION_SIZE = 8
    FC1_UNITS = 400          # module defaults
    FC2_UNITS = 300

    key = jax.random.PRNGKey(0)
    kp, kg, ks = jax.random.split(key, 3)

    params = init_actor_params(kp, STATE_SIZE, HER_FEATS, ACTION_SIZE,
                               FC1_UNITS, FC2_UNITS)
    goal = jax.random.normal(kg, (BATCH, HER_FEATS), jnp.float32)
    state = jax.random.normal(ks, (BATCH, STATE_SIZE), jnp.float32)

    out = actor_forward(goal, state, params, ACTION_SIZE)
    out = jax.block_until_ready(out)

    # Reference in plain JAX with identical bf16 quantization + f32 accumulation.
    w1, b1, w2, w3 = params
    x16 = jnp.concatenate([goal, state], axis=-1).astype(jnp.bfloat16)
    h1 = jnp.maximum(jnp.dot(x16, w1, preferred_element_type=jnp.float32) + b1, 0.0)
    h1 = h1.astype(jnp.bfloat16)
    h2 = jnp.maximum(jnp.dot(h1, w2, preferred_element_type=jnp.float32), 0.0)
    h2 = h2.astype(jnp.bfloat16)
    ref = jnp.tanh(jnp.dot(h2, w3, preferred_element_type=jnp.float32))
    ref = ref[:, :ACTION_SIZE].astype(jnp.float32)

    assert out.shape == (BATCH, ACTION_SIZE)
    max_err = float(jnp.max(jnp.abs(out - ref)))
    # Kernel stores the action in bf16 (deliberate: halves output HBM traffic),
    # so allow ~1 bf16 ULP of drift around |tanh| <= 1.
    assert jnp.allclose(out, ref, atol=1e-2, rtol=1e-2), f"max_err={max_err}"

    print("KERNEL_OK")
</pallas_src>

<mosaic_0001>
module attributes {stable_mosaic.version = 11 : i64} {
  func.func @actor_kernel(%arg0: i32, %arg1: memref<304x32xbf16, #tpu.memory_space<vmem>>, %arg2: memref<32x512xbf16, #tpu.memory_space<vmem>>, %arg3: memref<1x512xf32, #tpu.memory_space<vmem>>, %arg4: memref<512x384xbf16, #tpu.memory_space<vmem>>, %arg5: memref<384x128xbf16, #tpu.memory_space<vmem>>, %arg6: memref<304x128xbf16, #tpu.memory_space<vmem>>) attributes {dimension_semantics = [#tpu.dimension_semantics<parallel>], iteration_bounds = array<i64: 1>, scalar_prefetch = 0 : i64, scratch_operands = 0 : i64, tpu.core_type = #tpu.core_type<tc>, window_params = [{transform_indices = @transform_0, window_bounds = array<i64: 304, 32>}, {pipeline_mode = #tpu.pipeline_mode<synchronous>, transform_indices = @transform_1, window_bounds = array<i64: 32, 512>}, {pipeline_mode = #tpu.pipeline_mode<synchronous>, transform_indices = @transform_2, window_bounds = array<i64: 1, 512>}, {pipeline_mode = #tpu.pipeline_mode<synchronous>, transform_indices = @transform_3, window_bounds = array<i64: 512, 384>}, {pipeline_mode = #tpu.pipeline_mode<synchronous>, transform_indices = @transform_4, window_bounds = array<i64: 384, 128>}, {transform_indices = @transform_5, window_bounds = array<i64: 304, 128>}]} {
    %c0 = arith.constant 0 : index
    %c0_0 = arith.constant 0 : index
    %0 = vector.load %arg1[%c0, %c0_0] : memref<304x32xbf16, #tpu.memory_space<vmem>>, vector<304x32xbf16>
    %c0_1 = arith.constant 0 : index
    %c0_2 = arith.constant 0 : index
    %1 = vector.load %arg2[%c0_1, %c0_2] : memref<32x512xbf16, #tpu.memory_space<vmem>>, vector<32x512xbf16>
    %cst = arith.constant dense<0.000000e+00> : vector<304x512xf32>
    %2 = tpu.matmul %0, %1, %cst {dimension_numbers = #tpu.dot_dimension_numbers<[1], [0], [0], [1], [0, 0, 1, 1], [], []>} : vector<304x32xbf16>, vector<32x512xbf16>, vector<304x512xf32> -> vector<304x512xf32>
    %c0_3 = arith.constant 0 : index
    %c0_4 = arith.constant 0 : index
    %3 = vector.load %arg3[%c0_3, %c0_4] : memref<1x512xf32, #tpu.memory_space<vmem>>, vector<1x512xf32>
    %4 = vector.broadcast %3 : vector<1x512xf32> to vector<304x512xf32>
    %5 = arith.addf %2, %4 : vector<304x512xf32>
    %cst_5 = arith.constant 0.000000e+00 : f32
    %6 = vector.broadcast %cst_5 : f32 to vector<304x512xf32>
    %7 = arith.maximumf %5, %6 : vector<304x512xf32>
    %8 = arith.truncf %7 : vector<304x512xf32> to vector<304x512xbf16>
    %c0_6 = arith.constant 0 : index
    %c0_7 = arith.constant 0 : index
    %9 = vector.load %arg4[%c0_6, %c0_7] : memref<512x384xbf16, #tpu.memory_space<vmem>>, vector<512x384xbf16>
    %cst_8 = arith.constant dense<0.000000e+00> : vector<304x384xf32>
    %10 = tpu.matmul %8, %9, %cst_8 {dimension_numbers = #tpu.dot_dimension_numbers<[1], [0], [0], [1], [0, 0, 1, 1], [], []>} : vector<304x512xbf16>, vector<512x384xbf16>, vector<304x384xf32> -> vector<304x384xf32>
    %cst_9 = arith.constant 0.000000e+00 : f32
    %11 = vector.broadcast %cst_9 : f32 to vector<304x384xf32>
    %12 = arith.maximumf %10, %11 : vector<304x384xf32>
    %13 = arith.truncf %12 : vector<304x384xf32> to vector<304x384xbf16>
    %c0_10 = arith.constant 0 : index
    %c0_11 = arith.constant 0 : index
    %14 = vector.load %arg5[%c0_10, %c0_11] : memref<384x128xbf16, #tpu.memory_space<vmem>>, vector<384x128xbf16>
    %cst_12 = arith.constant dense<0.000000e+00> : vector<304x128xf32>
    %15 = tpu.matmul %13, %14, %cst_12 {dimension_numbers = #tpu.dot_dimension_numbers<[1], [0], [0], [1], [0, 0, 1, 1], [], []>} : vector<304x384xbf16>, vector<384x128xbf16>, vector<304x128xf32> -> vector<304x128xf32>
    %16 = math.tanh %15 : vector<304x128xf32>
    %17 = arith.truncf %16 : vector<304x128xf32> to vector<304x128xbf16>
    %c0_13 = arith.constant 0 : index
    %c0_14 = arith.constant 0 : index
    %18 = vector.load %arg6[%c0_13, %c0_14] : memref<304x128xbf16, #tpu.memory_space<vmem>>, vector<304x128xbf16>
    tpu.vector_store %arg6[%c0_13, %c0_14], %17 {strides = array<i32>} : memref<304x128xbf16, #tpu.memory_space<vmem>>, vector<304x128xbf16>,
    return
  }
  func.func @transform_0(%arg0: i32) -> (i32, i32) {
    %c0_i32 = arith.constant 0 : i32
    %c0_i32_0 = arith.constant 0 : i32
    return %arg0, %c0_i32 : i32, i32
  }
  func.func @transform_1(%arg0: i32) -> (i32, i32) {
    %c0_i32 = arith.constant 0 : i32
    %c0_i32_0 = arith.constant 0 : i32
    %c0_i32_1 = arith.constant 0 : i32
    return %c0_i32, %c0_i32_0 : i32, i32
  }
  func.func @transform_2(%arg0: i32) -> (i32, i32) {
    %c0_i32 = arith.constant 0 : i32
    %c0_i32_0 = arith.constant 0 : i32
    %c0_i32_1 = arith.constant 0 : i32
    return %c0_i32, %c0_i32_0 : i32, i32
  }
  func.func @transform_3(%arg0: i32) -> (i32, i32) {
    %c0_i32 = arith.constant 0 : i32
    %c0_i32_0 = arith.constant 0 : i32
    %c0_i32_1 = arith.constant 0 : i32
    return %c0_i32, %c0_i32_0 : i32, i32
  }
  func.func @transform_4(%arg0: i32) -> (i32, i32) {
    %c0_i32 = arith.constant 0 : i32
    %c0_i32_0 = arith.constant 0 : i32
    %c0_i32_1 = arith.constant 0 : i32
    return %c0_i32, %c0_i32_0 : i32, i32
  }
  func.func @transform_5(%arg0: i32) -> (i32, i32) {
    %c0_i32 = arith.constant 0 : i32
    %c0_i32_0 = arith.constant 0 : i32
    return %arg0, %c0_i32 : i32, i32
  }
}

</mosaic_0001>

<llo_original>
// kernel: tpu_custom_call.1
$region0: #{tpu_custom_call.1}
  #allocation0 [shape = 'u32[]', space=smem, size = 0x4, offset = 0x4, fixed_abs, tag = 'smem constant byte address 0x4 - core index']
  #allocation1 [shape = 'u32[144,128]{1,0:T(1,128)}', space=vmem, size = 0x12000, scoped, tag = 'internal scratch']
  %s0 = inlined_call_operand.vmem [shape: bf16[304,32], index: 0, kind: input, shape index: {}]
  %s1 = inlined_call_operand.hbm [shape: bf16[32,512], index: 1, kind: input, shape index: {}]
  %s2 = inlined_call_operand.vmem [shape: f32[1,512], index: 2, kind: input, shape index: {}]
  %s3 = inlined_call_operand.hbm [shape: bf16[512,384], index: 3, kind: input, shape index: {}]
  %s4 = inlined_call_operand.vmem [shape: bf16[384,128], index: 4, kind: input, shape index: {}]
  %s5 = inlined_call_operand.hbm [shape: bf16[304,128], index: 5, kind: output, shape index: {}]
  %s6 = sld [smem:[#allocation0]]
  $region38: #{tpu_custom_call.1} parent=0
    _
  %s8 = ssub.s32 1, %s6
  %s9 = scalar_select 0, %s8, %s6
  $region1: #{tpu_custom_call.1} parent=0
    #allocation2 [shape = 'u8[32768]{0}', space=vmem, size = 0x8000, scoped, tag = 'input window, operand 1, single buffered']
    #allocation3 [shape = 's32[1]{0}', space=sflag, size = 0x4, scoped, tag = 'scoped memory for tpu_custom_call.1']
    #allocation4 [shape = 's32[1]{0}', space=sflag, size = 0x4, scoped, tag = 'scoped memory for tpu_custom_call.1']
    #allocation5 [shape = 'u8[393216]{0}', space=vmem, size = 0x60000, scoped, tag = 'input window, operand 3, single buffered']
    #allocation6 [shape = 's32[1]{0}', space=sflag, size = 0x4, scoped, tag = 'scoped memory for tpu_custom_call.1']
    #allocation7 [shape = 'u8[77824]{0}', space=vmem, size = 0x13000, scoped, tag = 'output window, operand 0, single buffered']
    %10 = vsyncpa [#allocation3], 0
    %11 = vsyncpa [#allocation6], 0
    %12 = vsyncpa [#allocation4], 0
    // Predicated region
    $region2: #{tpu_custom_call.1} parent=1 // pred_check
      _
    $region3: #{tpu_custom_call.1} parent=1 // pred_check_branch
      %14 = sbr.rel (0) target = $region5
    $region4: #{tpu_custom_call.1} parent=1 // pred_region
      _
    $region5: #{tpu_custom_call.1} parent=1 // pred_fallthru
      _
    // Predicated region
    $region6: #{tpu_custom_call.1} parent=1 // pred_check
      _
    $region7: #{tpu_custom_call.1} parent=1 // pred_check_branch
      %16 = sbr.rel (0) target = $region9
    $region8: #{tpu_custom_call.1} parent=1 // pred_region
      %s18 = ssub.s32 1024, 1024
      %19 = vsyncadd [#allocation3], %s18
      %s20 = sshll.u32 [#allocation2], 4
      %s21 = int_to_ptr.vmem [resolvable:$true] %s20
      %26 = dma.hbm_to_vmem [thread:$0]  %s1, 1024, %s21, [#allocation3], 256, 256, 16
    $region9: #{tpu_custom_call.1} parent=1 // pred_fallthru
      _
    // Predicated region
    $region10: #{tpu_custom_call.1} parent=1 // pred_check
      _
    $region11: #{tpu_custom_call.1} parent=1 // pred_check_branch
      %28 = sbr.rel (0) target = $region13
    $region12: #{tpu_custom_call.1} parent=1 // pred_region
      _
    $region13: #{tpu_custom_call.1} parent=1 // pred_fallthru
      _
    // Predicated region
    $region14: #{tpu_custom_call.1} parent=1 // pred_check
      _
    $region15: #{tpu_custom_call.1} parent=1 // pred_check_branch
      %30 = sbr.rel (0) target = $region17
    $region16: #{tpu_custom_call.1} parent=1 // pred_region
      %s32 = ssub.s32 12288, 12288
      %33 = vsyncadd [#allocation6], %s32
      %s34 = sshll.u32 [#allocation5], 4
      %s35 = int_to_ptr.vmem [resolvable:$true] %s34
      %40 = dma.hbm_to_vmem [thread:$0]  %s3, 12288, %s35, [#allocation6], 192, 192, 12
    $region17: #{tpu_custom_call.1} parent=1 // pred_fallthru
      _
    // Predicated region
    $region18: #{tpu_custom_call.1} parent=1 // pred_check
      _
    $region19: #{tpu_custom_call.1} parent=1 // pred_check_branch
      %42 = sbr.rel (0) target = $region21
    $region20: #{tpu_custom_call.1} parent=1 // pred_region
      _
    $region21: #{tpu_custom_call.1} parent=1 // pred_fallthru
      _
    // Predicated region
    $region22: #{tpu_custom_call.1} parent=1 // pred_check
      _
    $region23: #{tpu_custom_call.1} parent=1 // pred_check_branch
      %44 = sbr.rel (0) target = $region25
    $region24: #{tpu_custom_call.1} parent=1 // pred_region
      %45 = dma.done [#allocation3], 1024
    $region25: #{tpu_custom_call.1} parent=1 // pred_fallthru
      _
    // Predicated region
    $region26: #{tpu_custom_call.1} parent=1 // pred_check
      _
    $region27: #{tpu_custom_call.1} parent=1 // pred_check_branch
      %47 = sbr.rel (0) target = $region29
    $region28: #{tpu_custom_call.1} parent=1 // pred_region
      %48 = dma.done [#allocation6], 12288
    $region29: #{tpu_custom_call.1} parent=1 // pred_fallthru
      _
    %v50 = vld [vmem:[%s0] sm:$0xf]
    %v51 = vld [vmem:[%s0 + $0x4] sm:$0xf]
    %v52 = vld [vmem:[%s0 + $0x8] sm:$0xf]
    %v53 = vld [vmem:[%s0 + $0xc] sm:$0xf]
    %v54 = vld [vmem:[%s0 + $0x10] sm:$0xf]
    %v55 = vld [vmem:[%s0 + $0x14] sm:$0xf]
    %v56 = vld [vmem:[%s0 + $0x18] sm:$0xf]
    %v57 = vld [vmem:[%s0 + $0x1c] sm:$0xf]
    %v58 = vld [vmem:[%s0 + $0x20] sm:$0xf]
    %v59 = vld [vmem:[%s0 + $0x24] sm:$0xf]
    %v60 = vld [vmem:[%s0 + $0x28] sm:$0xf]
    %v61 = vld [vmem:[%s0 + $0x2c] sm:$0xf]
    %v62 = vld [vmem:[%s0 + $0x30] sm:$0xf]
    %v63 = vld [vmem:[%s0 + $0x34] sm:$0xf]
    %v64 = vld [vmem:[%s0 + $0x38] sm:$0xf]
    %v65 = vld [vmem:[%s0 + $0x3c] sm:$0xf]
    %v66 = vld [vmem:[%s0 + $0x40] sm:$0xf]
    %v67 = vld [vmem:[%s0 + $0x44] sm:$0xf]
    %v68 = vld [vmem:[%s0 + $0x48] sm:$0xf]
    %v69 = vld [vmem:[%s0 + $0x4c] sm:$0xf]
    %v70 = vld [vmem:[%s0 + $0x50] sm:$0xf]
    %v71 = vld [vmem:[%s0 + $0x54] sm:$0xf]
    %v72 = vld [vmem:[%s0 + $0x58] sm:$0xf]
    %v73 = vld [vmem:[%s0 + $0x5c] sm:$0xf]
    %v74 = vld [vmem:[%s0 + $0x60] sm:$0xf]
    %v75 = vld [vmem:[%s0 + $0x64] sm:$0xf]
    %v76 = vld [vmem:[%s0 + $0x68] sm:$0xf]
    %v77 = vld [vmem:[%s0 + $0x6c] sm:$0xf]
    %v78 = vld [vmem:[%s0 + $0x70] sm:$0xf]
    %v79 = vld [vmem:[%s0 + $0x74] sm:$0xf]
    %v80 = vld [vmem:[%s0 + $0x78] sm:$0xf]
    %v81 = vld [vmem:[%s0 + $0x7c] sm:$0xf]
    %v82 = vld [vmem:[%s0 + $0x80] sm:$0xf]
    %v83 = vld [vmem:[%s0 + $0x84] sm:$0xf]
    %v84 = vld [vmem:[%s0 + $0x88] sm:$0xf]
    %v85 = vld [vmem:[%s0 + $0x8c] sm:$0xf]
    %v86 = vld [vmem:[%s0 + $0x90] sm:$0xf]
    %v87 = vld [vmem:[%s0 + $0x94] sm:$0xf]
    %v88 = vld [vmem:[#allocation2] sm:$0xff]
    %v89 = vld [vmem:[#allocation2 + $0x8] sm:$0xff]
    %v90 = vld [vmem:[#allocation2 + $0x10] sm:$0xff]
    %v91 = vld [vmem:[#allocation2 + $0x18] sm:$0xff]
    %v92 = vld [vmem:[#allocation2 + $0x20] sm:$0xff]
    %v93 = vld [vmem:[#allocation2 + $0x28] sm:$0xff]
    %v94 = vld [vmem:[#allocation2 + $0x30] sm:$0xff]
    %v95 = vld [vmem:[#allocation2 + $0x38] sm:$0xff]
    %v96 = vld [vmem:[%s2] sm:$0xf]
    %v98 = vlaneseq
    %v99 = vshrl.u32 %v98, 7
    %v100 = vsub.s32 0, %v99
    %v101 = vrot.slane %v96, %v100
    %v102 = vlaneseq
    %v103 = vshrl.u32 %v102, 7
    %v104 = vsub.s32 1, %v103
    %v105 = vrot.slane %v96, %v104
    %v106 = vlaneseq
    %v107 = vshrl.u32 %v106, 7
    %v108 = vsub.s32 2, %v107
    %v109 = vrot.slane %v96, %v108
    %v110 = vlaneseq
    %v111 = vshrl.u32 %v110, 7
    %v112 = vsub.s32 3, %v111
    %v113 = vrot.slane %v96, %v112
    %v156 = vunpack.c.l.b16 %v50
    %v157 = vunpack.c.l.b16 %v51
    %v158 = vunpack.c.l.b16 %v52
    %v159 = vunpack.c.l.b16 %v53
    %v160 = vunpack.c.l.b16 %v54
    %v161 = vunpack.c.l.b16 %v55
    %v162 = vunpack.c.l.b16 %v56
    %v163 = vunpack.c.l.b16 %v57
    %v164 = vunpack.c.l.b16 %v58
    %v165 = vunpack.c.l.b16 %v59
    %v166 = vunpack.c.l.b16 %v60
    %v167 = vunpack.c.l.b16 %v61
    %v168 = vunpack.c.l.b16 %v62
    %v169 = vunpack.c.l.b16 %v63
    %v170 = vunpack.c.l.b16 %v64
    %v171 = vunpack.c.l.b16 %v65
    %v172 = vunpack.c.l.b16 %v66
    %v173 = vunpack.c.l.b16 %v67
    %v174 = vunpack.c.l.b16 %v68
    %v175 = vunpack.c.l.b16 %v69
    %v176 = vunpack.c.l.b16 %v70
    %v177 = vunpack.c.l.b16 %v71
    %v178 = vunpack.c.l.b16 %v72
    %v179 = vunpack.c.l.b16 %v73
    %v180 = vunpack.c.l.b16 %v74
    %v181 = vunpack.c.l.b16 %v75
    %v182 = vunpack.c.l.b16 %v76
    %v183 = vunpack.c.l.b16 %v77
    %v184 = vunpack.c.l.b16 %v78
    %v185 = vunpack.c.l.b16 %v79
    %v186 = vunpack.c.l.b16 %v80
    %v187 = vunpack.c.l.b16 %v81
    %v188 = vunpack.c.l.b16 %v82
    %v189 = vunpack.c.l.b16 %v83
    %v190 = vunpack.c.l.b16 %v84
    %v191 = vunpack.c.l.b16 %v85
    %v192 = vunpack.c.l.b16 %v86
    %v193 = vunpack.c.l.b16 %v87
    %v194 = vpack.c.b16 %v157, %v156
    %v195 = vpack.c.b16 %v159, %v158
    %v196 = vpack.c.b16 %v161, %v160
    %v197 = vpack.c.b16 %v163, %v162
    %v198 = vpack.c.b16 %v165, %v164
    %v199 = vpack.c.b16 %v167, %v166
    %v200 = vpack.c.b16 %v169, %v168
    %v201 = vpack.c.b16 %v171, %v170
    %v202 = vpack.c.b16 %v173, %v172
    %v203 = vpack.c.b16 %v175, %v174
    %v204 = vpack.c.b16 %v177, %v176
    %v205 = vpack.c.b16 %v179, %v178
    %v206 = vpack.c.b16 %v181, %v180
    %v207 = vpack.c.b16 %v183, %v182
    %v208 = vpack.c.b16 %v185, %v184
    %v209 = vpack.c.b16 %v187, %v186
    %v210 = vpack.c.b16 %v189, %v188
    %v211 = vpack.c.b16 %v191, %v190
    %v212 = vpack.c.b16 %v193, %v192
    %v221 = vunpack.c.l.b16 %v88
    %v222 = vunpack.c.h.b16 %v88
    %v223 = vunpack.c.l.b16 %v89
    %v224 = vunpack.c.h.b16 %v89
    %v225 = vunpack.c.l.b16 %v90
    %v226 = vunpack.c.h.b16 %v90
    %v227 = vunpack.c.l.b16 %v91
    %v228 = vunpack.c.h.b16 %v91
    %v229 = vunpack.c.l.b16 %v92
    %v230 = vunpack.c.h.b16 %v92
    %v231 = vunpack.c.l.b16 %v93
    %v232 = vunpack.c.h.b16 %v93
    %v233 = vunpack.c.l.b16 %v94
    %v234 = vunpack.c.h.b16 %v94
    %v235 = vunpack.c.l.b16 %v95
    %v236 = vunpack.c.h.b16 %v95
    %v237 = vpack.c.b16 %v225, %v221
    %v238 = vpack.c.b16 %v226, %v222
    %v239 = vpack.c.b16 %v227, %v223
    %v240 = vpack.c.b16 %v228, %v224
    %v241 = vpack.c.b16 %v233, %v229
    %v242 = vpack.c.b16 %v234, %v230
    %v243 = vpack.c.b16 %v235, %v231
    %v244 = vpack.c.b16 %v236, %v232
    %vm253 = vcmask 261120
    %v255 = vsel %vm253, %v194, 0
    %v258 = vsel %vm253, %v195, 0
    %v261 = vsel %vm253, %v196, 0
    %v264 = vsel %vm253, %v197, 0
    %v267 = vsel %vm253, %v198, 0
    %v270 = vsel %vm253, %v199, 0
    %v273 = vsel %vm253, %v200, 0
    %v276 = vsel %vm253, %v201, 0
    %v279 = vsel %vm253, %v202, 0
    %v282 = vsel %vm253, %v203, 0
    %v285 = vsel %vm253, %v204, 0
    %v288 = vsel %vm253, %v205, 0
    %v291 = vsel %vm253, %v206, 0
    %v294 = vsel %vm253, %v207, 0
    %v297 = vsel %vm253, %v208, 0
    %v300 = vsel %vm253, %v209, 0
    %v303 = vsel %vm253, %v210, 0
    %v306 = vsel %vm253, %v211, 0
    %v309 = vsel %vm253, %v212, 0
    %311 = vmatprep.subr.bf16.mxu0 0
    %312 = vmatpush1.bf16.msra.mxu0 0
    %313 = vmatprep.subr.bf16.mxu0 0
    %314 = vmatpush1.bf16.msra.mxu0 0
    %315 = vmatprep.subr.bf16.mxu0 0
    %316 = vmatpush1.bf16.msra.mxu0 0
    %317 = vmatprep.subr.bf16.mxu0 0
    %318 = vmatpush1.bf16.msra.mxu0 0
    %319 = vmatprep.subr.bf16.mxu0 0
    %320 = vmatpush1.bf16.msra.mxu0 0
    %321 = vmatprep.subr.bf16.mxu0 0
    %322 = vmatpush1.bf16.msra.mxu0 0
    %323 = vmatprep.subr.bf16.mxu0 %v242
    %324 = vmatpush1.bf16.msra.mxu0 %v241
    %325 = vmatprep.subr.bf16.mxu0 %v238
    %326 = vmatpush1.bf16.msra.mxu0 %v237
    %327 = vmatprep.subr.bf16.mxu0 0
    %328 = vmatpush2.bf16.msra.mxu0 0
    %329 = vmatprep.subr.bf16.mxu0 0
    %330 = vmatpush2.bf16.msra.mxu0 0
    %331 = vmatprep.subr.bf16.mxu0 0
    %332 = vmatpush2.bf16.msra.mxu0 0
    %333 = vmatprep.subr.bf16.mxu0 0
    %334 = vmatpush2.bf16.msra.mxu0 0
    %335 = vmatprep.subr.bf16.mxu0 0
    %336 = vmatpush2.bf16.msra.mxu0 0
    %337 = vmatprep.subr.bf16.mxu0 0
    %338 = vmatpush2.bf16.msra.mxu0 0
    %339 = vmatprep.subr.bf16.mxu0 0
    %340 = vmatpush2.bf16.msra.mxu0 0
    %341 = vmatprep.subr.bf16.mxu0 0
    %342 = vmatpush2.bf16.msra.mxu0 0
    %343 = vmatprep.mubr.bf16.mxu0 0
    %344 = vmatmul.mubr.bf16.gmra.mxu0 %v255
    %v345 = vpop.f32.mrf.mxu0
    %v346 = vadd.f32 %v101, %v345
    %v347 = vpop.f32.mrf.mxu0
    %v348 = vadd.f32 %v105, %v347
    %v349 = vpop.f32.mrf.mxu0
    %v350 = vadd.f32 %v101, %v349
    %v351 = vpop.f32.mrf.mxu0
    %v352 = vadd.f32 %v105, %v351
    %353 = vmatprep.mubr.bf16.mxu0 0
    %354 = vmatmul.mubr.bf16.gmra.mxu0 %v258
    %v355 = vpop.f32.mrf.mxu0
    %v356 = vadd.f32 %v101, %v355
    %v357 = vpop.f32.mrf.mxu0
    %v358 = vadd.f32 %v105, %v357
    %v359 = vpop.f32.mrf.mxu0
    %v360 = vadd.f32 %v101, %v359
    %v361 = vpop.f32.mrf.mxu0
    %v362 = vadd.f32 %v105, %v361
    %363 = vmatprep.mubr.bf16.mxu0 0
    %364 = vmatmul.mubr.bf16.gmra.mxu0 %v261
    %v365 = vpop.f32.mrf.mxu0
    %v366 = vadd.f32 %v101, %v365
    %v367 = vpop.f32.mrf.mxu0
    %v368 = vadd.f32 %v105, %v367
    %v369 = vpop.f32.mrf.mxu0
    %v370 = vadd.f32 %v101, %v369
    %v371 = vpop.f32.mrf.mxu0
    %v372 = vadd.f32 %v105, %v371
    %373 = vmatprep.mubr.bf16.mxu0 0
    %374 = vmatmul.mubr.bf16.gmra.mxu0 %v264
    %v375 = vpop.f32.mrf.mxu0
    %v376 = vadd.f32 %v101, %v375
    %v377 = vpop.f32.mrf.mxu0
    %v378 = vadd.f32 %v105, %v377
    %v379 = vpop.f32.mrf.mxu0
    %v380 = vadd.f32 %v101, %v379
    %v381 = vpop.f32.mrf.mxu0
    %v382 = vadd.f32 %v105, %v381
    %383 = vmatprep.mubr.bf16.mxu0 0
    %384 = vmatmul.mubr.bf16.gmra.mxu0 %v267
    %v385 = vpop.f32.mrf.mxu0
    %v386 = vadd.f32 %v101, %v385
    %v387 = vpop.f32.mrf.mxu0
    %v388 = vadd.f32 %v105, %v387
    %v389 = vpop.f32.mrf.mxu0
    %v390 = vadd.f32 %v101, %v389
    %v391 = vpop.f32.mrf.mxu0
    %v392 = vadd.f32 %v105, %v391
    %393 = vmatprep.mubr.bf16.mxu0 0
    %394 = vmatmul.mubr.bf16.gmra.mxu0 %v270
    %v395 = vpop.f32.mrf.mxu0
    %v396 = vadd.f32 %v101, %v395
    %v397 = vpop.f32.mrf.mxu0
    %v398 = vadd.f32 %v105, %v397
    %v399 = vpop.f32.mrf.mxu0
    %v400 = vadd.f32 %v101, %v399
    %v401 = vpop.f32.mrf.mxu0
    %v402 = vadd.f32 %v105, %v401
    %403 = vmatprep.mubr.bf16.mxu0 0
    %404 = vmatmul.mubr.bf16.gmra.mxu0 %v273
    %v405 = vpop.f32.mrf.mxu0
    %v406 = vadd.f32 %v101, %v405
    %v407 = vpop.f32.mrf.mxu0
    %v408 = vadd.f32 %v105, %v407
    %v409 = vpop.f32.mrf.mxu0
    %v410 = vadd.f32 %v101, %v409
    %v411 = vpop.f32.mrf.mxu0
    %v412 = vadd.f32 %v105, %v411
    %413 = vmatprep.mubr.bf16.mxu0 0
    %414 = vmatmul.mubr.bf16.gmra.mxu0 %v276
    %v415 = vpop.f32.mrf.mxu0
    %v416 = vadd.f32 %v101, %v415
    %v417 = vpop.f32.mrf.mxu0
    %v418 = vadd.f32 %v105, %v417
    %v419 = vpop.f32.mrf.mxu0
    %v420 = vadd.f32 %v101, %v419
    %v421 = vpop.f32.mrf.mxu0
    %v422 = vadd.f32 %v105, %v421
    %423 = vmatprep.mubr.bf16.mxu0 0
    %424 = vmatmul.mubr.bf16.gmra.mxu0 %v279
    %v425 = vpop.f32.mrf.mxu0
    %v426 = vadd.f32 %v101, %v425
    %v427 = vpop.f32.mrf.mxu0
    %v428 = vadd.f32 %v105, %v427
    %v429 = vpop.f32.mrf.mxu0
    %v430 = vadd.f32 %v101, %v429
    %v431 = vpop.f32.mrf.mxu0
    %v432 = vadd.f32 %v105, %v431
    %433 = vmatprep.mubr.bf16.mxu0 0
    %434 = vmatmul.mubr.bf16.gmra.mxu0 %v282
    %v435 = vpop.f32.mrf.mxu0
    %v436 = vadd.f32 %v101, %v435
    %v437 = vpop.f32.mrf.mxu0
    %v438 = vadd.f32 %v105, %v437
    %v439 = vpop.f32.mrf.mxu0
    %v440 = vadd.f32 %v101, %v439
    %v441 = vpop.f32.mrf.mxu0
    %v442 = vadd.f32 %v105, %v441
    %443 = vmatprep.mubr.bf16.mxu0 0
    %444 = vmatmul.mubr.bf16.gmra.mxu0 %v285
    %v445 = vpop.f32.mrf.mxu0
    %v446 = vadd.f32 %v101, %v445
    %v447 = vpop.f32.mrf.mxu0
    %v448 = vadd.f32 %v105, %v447
    %v449 = vpop.f32.mrf.mxu0
    %v450 = vadd.f32 %v101, %v449
    %v451 = vpop.f32.mrf.mxu0
    %v452 = vadd.f32 %v105, %v451
    %453 = vmatprep.mubr.bf16.mxu0 0
    %454 = vmatmul.mubr.bf16.gmra.mxu0 %v288
    %v455 = vpop.f32.mrf.mxu0
    %v456 = vadd.f32 %v101, %v455
    %v457 = vpop.f32.mrf.mxu0
    %v458 = vadd.f32 %v105, %v457
    %v459 = vpop.f32.mrf.mxu0
    %v460 = vadd.f32 %v101, %v459
    %v461 = vpop.f32.mrf.mxu0
    %v462 = vadd.f32 %v105, %v461
    %463 = vmatprep.mubr.bf16.mxu0 0
    %464 = vmatmul.mubr.bf16.gmra.mxu0 %v291
    %v465 = vpop.f32.mrf.mxu0
    %v466 = vadd.f32 %v101, %v465
    %v467 = vpop.f32.mrf.mxu0
    %v468 = vadd.f32 %v105, %v467
    %v469 = vpop.f32.mrf.mxu0
    %v470 = vadd.f32 %v101, %v469
    %v471 = vpop.f32.mrf.mxu0
    %v472 = vadd.f32 %v105, %v471
    %473 = vmatprep.mubr.bf16.mxu0 0
    %474 = vmatmul.mubr.bf16.gmra.mxu0 %v294
    %v475 = vpop.f32.mrf.mxu0
    %v476 = vadd.f32 %v101, %v475
    %v477 = vpop.f32.mrf.mxu0
    %v478 = vadd.f32 %v105, %v477
    %v479 = vpop.f32.mrf.mxu0
    %v480 = vadd.f32 %v101, %v479
    %v481 = vpop.f32.mrf.mxu0
    %v482 = vadd.f32 %v105, %v481
    %483 = vmatprep.mubr.bf16.mxu0 0
    %484 = vmatmul.mubr.bf16.gmra.mxu0 %v297
    %v485 = vpop.f32.mrf.mxu0
    %v486 = vadd.f32 %v101, %v485
    %v487 = vpop.f32.mrf.mxu0
    %v488 = vadd.f32 %v105, %v487
    %v489 = vpop.f32.mrf.mxu0
    %v490 = vadd.f32 %v101, %v489
    %v491 = vpop.f32.mrf.mxu0
    %v492 = vadd.f32 %v105, %v491
    %493 = vmatprep.mubr.bf16.mxu0 0
    %494 = vmatmul.mubr.bf16.gmra.mxu0 %v300
    %v495 = vpop.f32.mrf.mxu0
    %v496 = vadd.f32 %v101, %v495
    %v497 = vpop.f32.mrf.mxu0
    %v498 = vadd.f32 %v105, %v497
    %v499 = vpop.f32.mrf.mxu0
    %v500 = vadd.f32 %v101, %v499
    %v501 = vpop.f32.mrf.mxu0
    %v502 = vadd.f32 %v105, %v501
    %503 = vmatprep.mubr.bf16.mxu0 0
    %504 = vmatmul.mubr.bf16.gmra.mxu0 %v303
    %v505 = vpop.f32.mrf.mxu0
    %v506 = vadd.f32 %v101, %v505
    %v507 = vpop.f32.mrf.mxu0
    %v508 = vadd.f32 %v105, %v507
    %v509 = vpop.f32.mrf.mxu0
    %v510 = vadd.f32 %v101, %v509
    %v511 = vpop.f32.mrf.mxu0
    %v512 = vadd.f32 %v105, %v511
    %513 = vmatprep.mubr.bf16.mxu0 0
    %514 = vmatmul.mubr.bf16.gmra.mxu0 %v306
    %v515 = vpop.f32.mrf.mxu0
    %v516 = vadd.f32 %v101, %v515
    %v517 = vpop.f32.mrf.mxu0
    %v518 = vadd.f32 %v105, %v517
    %v519 = vpop.f32.mrf.mxu0
    %v520 = vadd.f32 %v101, %v519
    %v521 = vpop.f32.mrf.mxu0
    %v522 = vadd.f32 %v105, %v521
    %523 = vmatprep.mubr.bf16.mxu0 0
    %524 = vmatmul.mubr.bf16.gmra.mxu0 %v309
    %v525 = vpop.f32.mrf.mxu0
    %v526 = vadd.f32 %v101, %v525
    %v527 = vpop.f32.mrf.mxu0
    %v528 = vadd.f32 %v105, %v527
    %v529 = vpop.f32.mrf.mxu0
    %v530 = vadd.f32 %v101, %v529
    %v531 = vpop.f32.mrf.mxu0
    %v532 = vadd.f32 %v105, %v531
    %533 = vdwg.mxu0
    %534 = vmatprep.subr.bf16.mxu0 0
    %535 = vmatpush1.bf16.msra.mxu0 0
    %536 = vmatprep.subr.bf16.mxu0 0
    %537 = vmatpush1.bf16.msra.mxu0 0
    %538 = vmatprep.subr.bf16.mxu0 0
    %539 = vmatpush1.bf16.msra.mxu0 0
    %540 = vmatprep.subr.bf16.mxu0 0
    %541 = vmatpush1.bf16.msra.mxu0 0
    %542 = vmatprep.subr.bf16.mxu0 0
    %543 = vmatpush1.bf16.msra.mxu0 0
    %544 = vmatprep.subr.bf16.mxu0 0
    %545 = vmatpush1.bf16.msra.mxu0 0
    %546 = vmatprep.subr.bf16.mxu0 %v244
    %547 = vmatpush1.bf16.msra.mxu0 %v243
    %548 = vmatprep.subr.bf16.mxu0 %v240
    %549 = vmatpush1.bf16.msra.mxu0 %v239
    %550 = vmatprep.subr.bf16.mxu0 0
    %551 = vmatpush2.bf16.msra.mxu0 0
    %552 = vmatprep.subr.bf16.mxu0 0
    %553 = vmatpush2.bf16.msra.mxu0 0
    %554 = vmatprep.subr.bf16.mxu0 0
    %555 = vmatpush2.bf16.msra.mxu0 0
    %556 = vmatprep.subr.bf16.mxu0 0
    %557 = vmatpush2.bf16.msra.mxu0 0
    %558 = vmatprep.subr.bf16.mxu0 0
    %559 = vmatpush2.bf16.msra.mxu0 0
    %560 = vmatprep.subr.bf16.mxu0 0
    %561 = vmatpush2.bf16.msra.mxu0 0
    %562 = vmatprep.subr.bf16.mxu0 0
    %563 = vmatpush2.bf16.msra.mxu0 0
    %564 = vmatprep.subr.bf16.mxu0 0
    %565 = vmatpush2.bf16.msra.mxu0 0
    %566 = vmatprep.mubr.bf16.mxu0 0
    %567 = vmatmul.mubr.bf16.gmra.mxu0 %v255
    %v568 = vpop.f32.mrf.mxu0
    %v569 = vadd.f32 %v109, %v568
    %v570 = vpop.f32.mrf.mxu0
    %v571 = vadd.f32 %v113, %v570
    %v572 = vpop.f32.mrf.mxu0
    %v573 = vadd.f32 %v109, %v572
    %v574 = vpop.f32.mrf.mxu0
    %v575 = vadd.f32 %v113, %v574
    %576 = vmatprep.mubr.bf16.mxu0 0
    %577 = vmatmul.mubr.bf16.gmra.mxu0 %v258
    %v578 = vpop.f32.mrf.mxu0
    %v579 = vadd.f32 %v109, %v578
    %v580 = vpop.f32.mrf.mxu0
    %v581 = vadd.f32 %v113, %v580
    %v582 = vpop.f32.mrf.mxu0
    %v583 = vadd.f32 %v109, %v582
    %v584 = vpop.f32.mrf.mxu0
    %v585 = vadd.f32 %v113, %v584
    %586 = vmatprep.mubr.bf16.mxu0 0
    %587 = vmatmul.mubr.bf16.gmra.mxu0 %v261
    %v588 = vpop.f32.mrf.mxu0
    %v589 = vadd.f32 %v109, %v588
    %v590 = vpop.f32.mrf.mxu0
    %v591 = vadd.f32 %v113, %v590
    %v592 = vpop.f32.mrf.mxu0
    %v593 = vadd.f32 %v109, %v592
    %v594 = vpop.f32.mrf.mxu0
    %v595 = vadd.f32 %v113, %v594
    %596 = vmatprep.mubr.bf16.mxu0 0
    %597 = vmatmul.mubr.bf16.gmra.mxu0 %v264
    %v598 = vpop.f32.mrf.mxu0
    %v599 = vadd.f32 %v109, %v598
    %v600 = vpop.f32.mrf.mxu0
    %v601 = vadd.f32 %v113, %v600
    %v602 = vpop.f32.mrf.mxu0
    %v603 = vadd.f32 %v109, %v602
    %v604 = vpop.f32.mrf.mxu0
    %v605 = vadd.f32 %v113, %v604
    %606 = vmatprep.mubr.bf16.mxu0 0
    %607 = vmatmul.mubr.bf16.gmra.mxu0 %v267
    %v608 = vpop.f32.mrf.mxu0
    %v609 = vadd.f32 %v109, %v608
    %v610 = vpop.f32.mrf.mxu0
    %v611 = vadd.f32 %v113, %v610
    %v612 = vpop.f32.mrf.mxu0
    %v613 = vadd.f32 %v109, %v612
    %v614 = vpop.f32.mrf.mxu0
    %v615 = vadd.f32 %v113, %v614
    %616 = vmatprep.mubr.bf16.mxu0 0
    %617 = vmatmul.mubr.bf16.gmra.mxu0 %v270
    %v618 = vpop.f32.mrf.mxu0
    %v619 = vadd.f32 %v109, %v618
    %v620 = vpop.f32.mrf.mxu0
    %v621 = vadd.f32 %v113, %v620
    %v622 = vpop.f32.mrf.mxu0
    %v623 = vadd.f32 %v109, %v622
    %v624 = vpop.f32.mrf.mxu0
    %v625 = vadd.f32 %v113, %v624
    %626 = vmatprep.mubr.bf16.mxu0 0
    %627 = vmatmul.mubr.bf16.gmra.mxu0 %v273
    %v628 = vpop.f32.mrf.mxu0
    %v629 = vadd.f32 %v109, %v628
    %v630 = vpop.f32.mrf.mxu0
    %v631 = vadd.f32 %v113, %v630
    %v632 = vpop.f32.mrf.mxu0
    %v633 = vadd.f32 %v109, %v632
    %v634 = vpop.f32.mrf.mxu0
    %v635 = vadd.f32 %v113, %v634
    %636 = vmatprep.mubr.bf16.mxu0 0
    %637 = vmatmul.mubr.bf16.gmra.mxu0 %v276
    %v638 = vpop.f32.mrf.mxu0
    %v639 = vadd.f32 %v109, %v638
    %v640 = vpop.f32.mrf.mxu0
    %v641 = vadd.f32 %v113, %v640
    %v642 = vpop.f32.mrf.mxu0
    %v643 = vadd.f32 %v109, %v642
    %v644 = vpop.f32.mrf.mxu0
    %v645 = vadd.f32 %v113, %v644
    %646 = vmatprep.mubr.bf16.mxu0 0
    %647 = vmatmul.mubr.bf16.gmra.mxu0 %v279
    %v648 = vpop.f32.mrf.mxu0
    %v649 = vadd.f32 %v109, %v648
    %v650 = vpop.f32.mrf.mxu0
    %v651 = vadd.f32 %v113, %v650
    %v652 = vpop.f32.mrf.mxu0
    %v653 = vadd.f32 %v109, %v652
    %v654 = vpop.f32.mrf.mxu0
    %v655 = vadd.f32 %v113, %v654
    %656 = vmatprep.mubr.bf16.mxu0 0
    %657 = vmatmul.mubr.bf16.gmra.mxu0 %v282
    %v658 = vpop.f32.mrf.mxu0
    %v659 = vadd.f32 %v109, %v658
    %v660 = vpop.f32.mrf.mxu0
    %v661 = vadd.f32 %v113, %v660
    %v662 = vpop.f32.mrf.mxu0
    %v663 = vadd.f32 %v109, %v662
    %v664 = vpop.f32.mrf.mxu0
    %v665 = vadd.f32 %v113, %v664
    %666 = vmatprep.mubr.bf16.mxu0 0
    %667 = vmatmul.mubr.bf16.gmra.mxu0 %v285
    %v668 = vpop.f32.mrf.mxu0
    %v669 = vadd.f32 %v109, %v668
    %v670 = vpop.f32.mrf.mxu0
    %v671 = vadd.f32 %v113, %v670
    %v672 = vpop.f32.mrf.mxu0
    %v673 = vadd.f32 %v109, %v672
    %v674 = vpop.f32.mrf.mxu0
    %v675 = vadd.f32 %v113, %v674
    %676 = vmatprep.mubr.bf16.mxu0 0
    %677 = vmatmul.mubr.bf16.gmra.mxu0 %v288
    %v678 = vpop.f32.mrf.mxu0
    %v679 = vadd.f32 %v109, %v678
    %v680 = vpop.f32.mrf.mxu0
    %v681 = vadd.f32 %v113, %v680
    %v682 = vpop.f32.mrf.mxu0
    %v683 = vadd.f32 %v109, %v682
    %v684 = vpop.f32.mrf.mxu0
    %v685 = vadd.f32 %v113, %v684
    %686 = vmatprep.mubr.bf16.mxu0 0
    %687 = vmatmul.mubr.bf16.gmra.mxu0 %v291
    %v688 = vpop.f32.mrf.mxu0
    %v689 = vadd.f32 %v109, %v688
    %v690 = vpop.f32.mrf.mxu0
    %v691 = vadd.f32 %v113, %v690
    %v692 = vpop.f32.mrf.mxu0
    %v693 = vadd.f32 %v109, %v692
    %v694 = vpop.f32.mrf.mxu0
    %v695 = vadd.f32 %v113, %v694
    %696 = vmatprep.mubr.bf16.mxu0 0
    %697 = vmatmul.mubr.bf16.gmra.mxu0 %v294
    %v698 = vpop.f32.mrf.mxu0
    %v699 = vadd.f32 %v109, %v698
    %v700 = vpop.f32.mrf.mxu0
    %v701 = vadd.f32 %v113, %v700
    %v702 = vpop.f32.mrf.mxu0
    %v703 = vadd.f32 %v109, %v702
    %v704 = vpop.f32.mrf.mxu0
    %v705 = vadd.f32 %v113, %v704
    %706 = vmatprep.mubr.bf16.mxu0 0
    %707 = vmatmul.mubr.bf16.gmra.mxu0 %v297
    %v708 = vpop.f32.mrf.mxu0
    %v709 = vadd.f32 %v109, %v708
    %v710 = vpop.f32.mrf.mxu0
    %v711 = vadd.f32 %v113, %v710
    %v712 = vpop.f32.mrf.mxu0
    %v713 = vadd.f32 %v109, %v712
    %v714 = vpop.f32.mrf.mxu0
    %v715 = vadd.f32 %v113, %v714
    %716 = vmatprep.mubr.bf16.mxu0 0
    %717 = vmatmul.mubr.bf16.gmra.mxu0 %v300
    %v718 = vpop.f32.mrf.mxu0
    %v719 = vadd.f32 %v109, %v718
    %v720 = vpop.f32.mrf.mxu0
    %v721 = vadd.f32 %v113, %v720
    %v722 = vpop.f32.mrf.mxu0
    %v723 = vadd.f32 %v109, %v722
    %v724 = vpop.f32.mrf.mxu0
    %v725 = vadd.f32 %v113, %v724
    %726 = vmatprep.mubr.bf16.mxu0 0
    %727 = vmatmul.mubr.bf16.gmra.mxu0 %v303
    %v728 = vpop.f32.mrf.mxu0
    %v729 = vadd.f32 %v109, %v728
    %v730 = vpop.f32.mrf.mxu0
    %v731 = vadd.f32 %v113, %v730
    %v732 = vpop.f32.mrf.mxu0
    %v733 = vadd.f32 %v109, %v732
    %v734 = vpop.f32.mrf.mxu0
    %v735 = vadd.f32 %v113, %v734
    %736 = vmatprep.mubr.bf16.mxu0 0
    %737 = vmatmul.mubr.bf16.gmra.mxu0 %v306
    %v738 = vpop.f32.mrf.mxu0
    %v739 = vadd.f32 %v109, %v738
    %v740 = vpop.f32.mrf.mxu0
    %v741 = vadd.f32 %v113, %v740
    %v742 = vpop.f32.mrf.mxu0
    %v743 = vadd.f32 %v109, %v742
    %v744 = vpop.f32.mrf.mxu0
    %v745 = vadd.f32 %v113, %v744
    %746 = vmatprep.mubr.bf16.mxu0 0
    %747 = vmatmul.mubr.bf16.gmra.mxu0 %v309
    %v748 = vpop.f32.mrf.mxu0
    %v749 = vadd.f32 %v109, %v748
    %v750 = vpop.f32.mrf.mxu0
    %v751 = vadd.f32 %v113, %v750
    %v752 = vpop.f32.mrf.mxu0
    %v753 = vadd.f32 %v109, %v752
    %v754 = vpop.f32.mrf.mxu0
    %v755 = vadd.f32 %v113, %v754
    %756 = vdwg.mxu0
    %v757 = vmax.f32 %v346, 0.0
    %v758 = vmax.f32 %v348, 0.0
    %v759 = vmax.f32 %v569, 0.0
    %v760 = vmax.f32 %v571, 0.0
    %v761 = vmax.f32 %v350, 0.0
    %v762 = vmax.f32 %v352, 0.0
    %v763 = vmax.f32 %v573, 0.0
    %v764 = vmax.f32 %v575, 0.0
    %v765 = vmax.f32 %v356, 0.0
    %v766 = vmax.f32 %v358, 0.0
    %v767 = vmax.f32 %v579, 0.0
    %v768 = vmax.f32 %v581, 0.0
    %v769 = vmax.f32 %v360, 0.0
    %v770 = vmax.f32 %v362, 0.0
    %v771 = vmax.f32 %v583, 0.0
    %v772 = vmax.f32 %v585, 0.0
    %v773 = vmax.f32 %v366, 0.0
    %v774 = vmax.f32 %v368, 0.0
    %v775 = vmax.f32 %v589, 0.0
    %v776 = vmax.f32 %v591, 0.0
    %v777 = vmax.f32 %v370, 0.0
    %v778 = vmax.f32 %v372, 0.0
    %v779 = vmax.f32 %v593, 0.0
    %v780 = vmax.f32 %v595, 0.0
    %v781 = vmax.f32 %v376, 0.0
    %v782 = vmax.f32 %v378, 0.0
    %v783 = vmax.f32 %v599, 0.0
    %v784 = vmax.f32 %v601, 0.0
    %v785 = vmax.f32 %v380, 0.0
    %v786 = vmax.f32 %v382, 0.0
    %v787 = vmax.f32 %v603, 0.0
    %v788 = vmax.f32 %v605, 0.0
    %v789 = vmax.f32 %v386, 0.0
    %v790 = vmax.f32 %v388, 0.0
    %v791 = vmax.f32 %v609, 0.0
    %v792 = vmax.f32 %v611, 0.0
    %v793 = vmax.f32 %v390, 0.0
    %v794 = vmax.f32 %v392, 0.0
    %v795 = vmax.f32 %v613, 0.0
    %v796 = vmax.f32 %v615, 0.0
    %v797 = vmax.f32 %v396, 0.0
    %v798 = vmax.f32 %v398, 0.0
    %v799 = vmax.f32 %v619, 0.0
    %v800 = vmax.f32 %v621, 0.0
    %v801 = vmax.f32 %v400, 0.0
    %v802 = vmax.f32 %v402, 0.0
    %v803 = vmax.f32 %v623, 0.0
    %v804 = vmax.f32 %v625, 0.0
    %v805 = vmax.f32 %v406, 0.0
    %v806 = vmax.f32 %v408, 0.0
    %v807 = vmax.f32 %v629, 0.0
    %v808 = vmax.f32 %v631, 0.0
    %v809 = vmax.f32 %v410, 0.0
    %v810 = vmax.f32 %v412, 0.0
    %v811 = vmax.f32 %v633, 0.0
    %v812 = vmax.f32 %v635, 0.0
    %v813 = vmax.f32 %v416, 0.0
    %v814 = vmax.f32 %v418, 0.0
    %v815 = vmax.f32 %v639, 0.0
    %v816 = vmax.f32 %v641, 0.0
    %v817 = vmax.f32 %v420, 0.0
    %v818 = vmax.f32 %v422, 0.0
    %v819 = vmax.f32 %v643, 0.0
    %v820 = vmax.f32 %v645, 0.0
    %v821 = vmax.f32 %v426, 0.0
    %v822 = vmax.f32 %v428, 0.0
    %v823 = vmax.f32 %v649, 0.0
    %v824 = vmax.f32 %v651, 0.0
    %v825 = vmax.f32 %v430, 0.0
    %v826 = vmax.f32 %v432, 0.0
    %v827 = vmax.f32 %v653, 0.0
    %v828 = vmax.f32 %v655, 0.0
    %v829 = vmax.f32 %v436, 0.0
    %v830 = vmax.f32 %v438, 0.0
    %v831 = vmax.f32 %v659, 0.0
    %v832 = vmax.f32 %v661, 0.0
    %v833 = vmax.f32 %v440, 0.0
    %v834 = vmax.f32 %v442, 0.0
    %v835 = vmax.f32 %v663, 0.0
    %v836 = vmax.f32 %v665, 0.0
    %v837 = vmax.f32 %v446, 0.0
    %v838 = vmax.f32 %v448, 0.0
    %v839 = vmax.f32 %v669, 0.0
    %v840 = vmax.f32 %v671, 0.0
    %v841 = vmax.f32 %v450, 0.0
    %v842 = vmax.f32 %v452, 0.0
    %v843 = vmax.f32 %v673, 0.0
    %v844 = vmax.f32 %v675, 0.0
    %v845 = vmax.f32 %v456, 0.0
    %v846 = vmax.f32 %v458, 0.0
    %v847 = vmax.f32 %v679, 0.0
    %v848 = vmax.f32 %v681, 0.0
    %v849 = vmax.f32 %v460, 0.0
    %v850 = vmax.f32 %v462, 0.0
    %v851 = vmax.f32 %v683, 0.0
    %v852 = vmax.f32 %v685, 0.0
    %v853 = vmax.f32 %v466, 0.0
    %v854 = vmax.f32 %v468, 0.0
    %v855 = vmax.f32 %v689, 0.0
    %v856 = vmax.f32 %v691, 0.0
    %v857 = vmax.f32 %v470, 0.0
    %v858 = vmax.f32 %v472, 0.0
    %v859 = vmax.f32 %v693, 0.0
    %v860 = vmax.f32 %v695, 0.0
    %v861 = vmax.f32 %v476, 0.0
    %v862 = vmax.f32 %v478, 0.0
    %v863 = vmax.f32 %v699, 0.0
    %v864 = vmax.f32 %v701, 0.0
    %v865 = vmax.f32 %v480, 0.0
    %v866 = vmax.f32 %v482, 0.0
    %v867 = vmax.f32 %v703, 0.0
    %v868 = vmax.f32 %v705, 0.0
    %v869 = vmax.f32 %v486, 0.0
    %v870 = vmax.f32 %v488, 0.0
    %v871 = vmax.f32 %v709, 0.0
    %v872 = vmax.f32 %v711, 0.0
    %v873 = vmax.f32 %v490, 0.0
    %v874 = vmax.f32 %v492, 0.0
    %v875 = vmax.f32 %v713, 0.0
    %v876 = vmax.f32 %v715, 0.0
    %v877 = vmax.f32 %v496, 0.0
    %v878 = vmax.f32 %v498, 0.0
    %v879 = vmax.f32 %v719, 0.0
    %v880 = vmax.f32 %v721, 0.0
    %v881 = vmax.f32 %v500, 0.0
    %v882 = vmax.f32 %v502, 0.0
    %v883 = vmax.f32 %v723, 0.0
    %v884 = vmax.f32 %v725, 0.0
    %v885 = vmax.f32 %v506, 0.0
    %v886 = vmax.f32 %v508, 0.0
    %v887 = vmax.f32 %v729, 0.0
    %v888 = vmax.f32 %v731, 0.0
    %v889 = vmax.f32 %v510, 0.0
    %v890 = vmax.f32 %v512, 0.0
    %v891 = vmax.f32 %v733, 0.0
    %v892 = vmax.f32 %v735, 0.0
    %v893 = vmax.f32 %v516, 0.0
    %v894 = vmax.f32 %v518, 0.0
    %v895 = vmax.f32 %v739, 0.0
    %v896 = vmax.f32 %v741, 0.0
    %v897 = vmax.f32 %v520, 0.0
    %v898 = vmax.f32 %v522, 0.0
    %v899 = vmax.f32 %v743, 0.0
    %v900 = vmax.f32 %v745, 0.0
    %v901 = vmax.f32 %v526, 0.0
    %v902 = vmax.f32 %v528, 0.0
    %v903 = vmax.f32 %v749, 0.0
    %v904 = vmax.f32 %v751, 0.0
    %v905 = vmax.f32 %v530, 0.0
    %v906 = vmax.f32 %v532, 0.0
    %v907 = vmax.f32 %v753, 0.0
    %v908 = vmax.f32 %v755, 0.0
    %v909 = vpack.c.bf16 %v761, %v757
    %v910 = vpack.c.bf16 %v762, %v758
    %v911 = vpack.c.bf16 %v763, %v759
    %v912 = vpack.c.bf16 %v764, %v760
    %v913 = vpack.c.bf16 %v769, %v765
    %v914 = vpack.c.bf16 %v770, %v766
    %v915 = vpack.c.bf16 %v771, %v767
    %v916 = vpack.c.bf16 %v772, %v768
    %v917 = vpack.c.bf16 %v777, %v773
    %v918 = vpack.c.bf16 %v778, %v774
    %v919 = vpack.c.bf16 %v779, %v775
    %v920 = vpack.c.bf16 %v780, %v776
    %v921 = vpack.c.bf16 %v785, %v781
    %v922 = vpack.c.bf16 %v786, %v782
    %v923 = vpack.c.bf16 %v787, %v783
    %v924 = vpack.c.bf16 %v788, %v784
    %v925 = vpack.c.bf16 %v793, %v789
    %v926 = vpack.c.bf16 %v794, %v790
    %v927 = vpack.c.bf16 %v795, %v791
    %v928 = vpack.c.bf16 %v796, %v792
    %v929 = vpack.c.bf16 %v801, %v797
    %v930 = vpack.c.bf16 %v802, %v798
    %v931 = vpack.c.bf16 %v803, %v799
    %v932 = vpack.c.bf16 %v804, %v800
    %v933 = vpack.c.bf16 %v809, %v805
    %v934 = vpack.c.bf16 %v810, %v806
    %v935 = vpack.c.bf16 %v811, %v807
    %v936 = vpack.c.bf16 %v812, %v808
    %v937 = vpack.c.bf16 %v817, %v813
    %v938 = vpack.c.bf16 %v818, %v814
    %v939 = vpack.c.bf16 %v819, %v815
    %v940 = vpack.c.bf16 %v820, %v816
    %v941 = vpack.c.bf16 %v825, %v821
    %v942 = vpack.c.bf16 %v826, %v822
    %v943 = vpack.c.bf16 %v827, %v823
    %v944 = vpack.c.bf16 %v828, %v824
    %v945 = vpack.c.bf16 %v833, %v829
    %v946 = vpack.c.bf16 %v834, %v830
    %v947 = vpack.c.bf16 %v835, %v831
    %v948 = vpack.c.bf16 %v836, %v832
    %v949 = vpack.c.bf16 %v841, %v837
    %v950 = vpack.c.bf16 %v842, %v838
    %v951 = vpack.c.bf16 %v843, %v839
    %v952 = vpack.c.bf16 %v844, %v840
    %v953 = vpack.c.bf16 %v849, %v845
    %v954 = vpack.c.bf16 %v850, %v846
    %v955 = vpack.c.bf16 %v851, %v847
    %v956 = vpack.c.bf16 %v852, %v848
    %v957 = vpack.c.bf16 %v857, %v853
    %v958 = vpack.c.bf16 %v858, %v854
    %v959 = vpack.c.bf16 %v859, %v855
    %v960 = vpack.c.bf16 %v860, %v856
    %v961 = vpack.c.bf16 %v865, %v861
    %v962 = vpack.c.bf16 %v866, %v862
    %v963 = vpack.c.bf16 %v867, %v863
    %v964 = vpack.c.bf16 %v868, %v864
    %v965 = vpack.c.bf16 %v873, %v869
    %v966 = vpack.c.bf16 %v874, %v870
    %v967 = vpack.c.bf16 %v875, %v871
    %v968 = vpack.c.bf16 %v876, %v872
    %v969 = vpack.c.bf16 %v881, %v877
    %v970 = vpack.c.bf16 %v882, %v878
    %v971 = vpack.c.bf16 %v883, %v879
    %v972 = vpack.c.bf16 %v884, %v880
    %v973 = vpack.c.bf16 %v889, %v885
    %v974 = vpack.c.bf16 %v890, %v886
    %v975 = vpack.c.bf16 %v891, %v887
    %v976 = vpack.c.bf16 %v892, %v888
    %v977 = vpack.c.bf16 %v897, %v893
    %v978 = vpack.c.bf16 %v898, %v894
    %v979 = vpack.c.bf16 %v899, %v895
    %v980 = vpack.c.bf16 %v900, %v896
    %v981 = vpack.c.bf16 %v905, %v901
    %v982 = vpack.c.bf16 %v906, %v902
    %v983 = vpack.c.bf16 %v907, %v903
    %v984 = vpack.c.bf16 %v908, %v904
    %v985 = vld [vmem:[#allocation5] sm:$0xff]
    %v986 = vld [vmem:[#allocation5 + $0x8] sm:$0xf]
    %v987 = vld [vmem:[#allocation5 + $0xc] sm:$0xff]
    %v988 = vld [vmem:[#allocation5 + $0x14] sm:$0xf]
    %v989 = vld [vmem:[#allocation5 + $0x18] sm:$0xff]
    %v990 = vld [vmem:[#allocation5 + $0x20] sm:$0xf]
    %v991 = vld [vmem:[#allocation5 + $0x24] sm:$0xff]
    %v992 = vld [vmem:[#allocation5 + $0x2c] sm:$0xf]
    %v993 = vld [vmem:[#allocation5 + $0x30] sm:$0xff]
    %v994 = vld [vmem:[#allocation5 + $0x38] sm:$0xf]
    %v995 = vld [vmem:[#allocation5 + $0x3c] sm:$0xff]
    %v996 = vld [vmem:[#allocation5 + $0x44] sm:$0xf]
    %v997 = vld [vmem:[#allocation5 + $0x48] sm:$0xff]
    %v998 = vld [vmem:[#allocation5 + $0x50] sm:$0xf]
    %v999 = vld [vmem:[#allocation5 + $0x54] sm:$0xff]
    %v1000 = vld [vmem:[#allocation5 + $0x5c] sm:$0xf]
    %v1001 = vld [vmem:[#allocation5 + $0x60] sm:$0xff]
    %v1002 = vld [vmem:[#allocation5 + $0x68] sm:$0xf]
    %v1003 = vld [vmem:[#allocation5 + $0x6c] sm:$0xff]
    %v1004 = vld [vmem:[#allocation5 + $0x74] sm:$0xf]
    %v1005 = vld [vmem:[#allocation5 + $0x78] sm:$0xff]
    %v1006 = vld [vmem:[#allocation5 + $0x80] sm:$0xf]
    %v1007 = vld [vmem:[#allocation5 + $0x84] sm:$0xff]
    %v1008 = vld [vmem:[#allocation5 + $0x8c] sm:$0xf]
    %v1009 = vld [vmem:[#allocation5 + $0x90] sm:$0xff]
    %v1010 = vld [vmem:[#allocation5 + $0x98] sm:$0xf]
    %v1011 = vld [vmem:[#allocation5 + $0x9c] sm:$0xff]
    %v1012 = vld [vmem:[#allocation5 + $0xa4] sm:$0xf]
    %v1013 = vld [vmem:[#allocation5 + $0xa8] sm:$0xff]
    %v1014 = vld [vmem:[#allocation5 + $0xb0] sm:$0xf]
    %v1015 = vld [vmem:[#allocation5 + $0xb4] sm:$0xff]
    %v1016 = vld [vmem:[#allocation5 + $0xbc] sm:$0xf]
    %v1017 = vld [vmem:[#allocation5 + $0xc0] sm:$0xff]
    %v1018 = vld [vmem:[#allocation5 + $0xc8] sm:$0xf]
    %v1019 = vld [vmem:[#allocation5 + $0xcc] sm:$0xff]
    %v1020 = vld [vmem:[#allocation5 + $0xd4] sm:$0xf]
    %v1021 = vld [vmem:[#allocation5 + $0xd8] sm:$0xff]
    %v1022 = vld [vmem:[#allocation5 + $0xe0] sm:$0xf]
    %v1023 = vld [vmem:[#allocation5 + $0xe4] sm:$0xff]
    %v1024 = vld [vmem:[#allocation5 + $0xec] sm:$0xf]
    %v1025 = vld [vmem:[#allocation5 + $0xf0] sm:$0xff]
    %v1026 = vld [vmem:[#allocation5 + $0xf8] sm:$0xf]
    %v1027 = vld [vmem:[#allocation5 + $0xfc] sm:$0xff]
    %v1028 = vld [vmem:[#allocation5 + $0x104] sm:$0xf]
    %v1029 = vld [vmem:[#allocation5 + $0x108] sm:$0xff]
    %v1030 = vld [vmem:[#allocation5 + $0x110] sm:$0xf]
    %v1031 = vld [vmem:[#allocation5 + $0x114] sm:$0xff]
    %v1032 = vld [vmem:[#allocation5 + $0x11c] sm:$0xf]
    %v1033 = vld [vmem:[#allocation5 + $0x120] sm:$0xff]
    %v1034 = vld [vmem:[#allocation5 + $0x128] sm:$0xf]
    %v1035 = vld [vmem:[#allocation5 + $0x12c] sm:$0xff]
    %v1036 = vld [vmem:[#allocation5 + $0x134] sm:$0xf]
    %v1037 = vld [vmem:[#allocation5 + $0x138] sm:$0xff]
    %v1038 = vld [vmem:[#allocation5 + $0x140] sm:$0xf]
    %v1039 = vld [vmem:[#allocation5 + $0x144] sm:$0xff]
    %v1040 = vld [vmem:[#allocation5 + $0x14c] sm:$0xf]
    %v1041 = vld [vmem:[#allocation5 + $0x150] sm:$0xff]
    %v1042 = vld [vmem:[#allocation5 + $0x158] sm:$0xf]
    %v1043 = vld [vmem:[#allocation5 + $0x15c] sm:$0xff]
    %v1044 = vld [vmem:[#allocation5 + $0x164] sm:$0xf]
    %v1045 = vld [vmem:[#allocation5 + $0x168] sm:$0xff]
    %v1046 = vld [vmem:[#allocation5 + $0x170] sm:$0xf]
    %v1047 = vld [vmem:[#allocation5 + $0x174] sm:$0xff]
    %v1048 = vld [vmem:[#allocation5 + $0x17c] sm:$0xf]
    %v1049 = vld [vmem:[#allocation5 + $0x180] sm:$0xff]
    %v1050 = vld [vmem:[#allocation5 + $0x188] sm:$0xf]
    %v1051 = vld [vmem:[#allocation5 + $0x18c] sm:$0xff]
    %v1052 = vld [vmem:[#allocation5 + $0x194] sm:$0xf]
    %v1053 = vld [vmem:[#allocation5 + $0x198] sm:$0xff]
    %v1054 = vld [vmem:[#allocation5 + $0x1a0] sm:$0xf]
    %v1055 = vld [vmem:[#allocation5 + $0x1a4] sm:$0xff]
    %v1056 = vld [vmem:[#allocation5 + $0x1ac] sm:$0xf]
    %v1057 = vld [vmem:[#allocation5 + $0x1b0] sm:$0xff]
    %v1058 = vld [vmem:[#allocation5 + $0x1b8] sm:$0xf]
    %v1059 = vld [vmem:[#allocation5 + $0x1bc] sm:$0xff]
    %v1060 = vld [vmem:[#allocation5 + $0x1c4] sm:$0xf]
    %v1061 = vld [vmem:[#allocation5 + $0x1c8] sm:$0xff]
    %v1062 = vld [vmem:[#allocation5 + $0x1d0] sm:$0xf]
    %v1063 = vld [vmem:[#allocation5 + $0x1d4] sm:$0xff]
    %v1064 = vld [vmem:[#allocation5 + $0x1dc] sm:$0xf]
    %v1065 = vld [vmem:[#allocation5 + $0x1e0] sm:$0xff]
    %v1066 = vld [vmem:[#allocation5 + $0x1e8] sm:$0xf]
    %v1067 = vld [vmem:[#allocation5 + $0x1ec] sm:$0xff]
    %v1068 = vld [vmem:[#allocation5 + $0x1f4] sm:$0xf]
    %v1069 = vld [vmem:[#allocation5 + $0x1f8] sm:$0xff]
    %v1070 = vld [vmem:[#allocation5 + $0x200] sm:$0xf]
    %v1071 = vld [vmem:[#allocation5 + $0x204] sm:$0xff]
    %v1072 = vld [vmem:[#allocation5 + $0x20c] sm:$0xf]
    %v1073 = vld [vmem:[#allocation5 + $0x210] sm:$0xff]
    %v1074 = vld [vmem:[#allocation5 + $0x218] sm:$0xf]
    %v1075 = vld [vmem:[#allocation5 + $0x21c] sm:$0xff]
    %v1076 = vld [vmem:[#allocation5 + $0x224] sm:$0xf]
    %v1077 = vld [vmem:[#allocation5 + $0x228] sm:$0xff]
    %v1078 = vld [vmem:[#allocation5 + $0x230] sm:$0xf]
    %v1079 = vld [vmem:[#allocation5 + $0x234] sm:$0xff]
    %v1080 = vld [vmem:[#allocation5 + $0x23c] sm:$0xf]
    %v1081 = vld [vmem:[#allocation5 + $0x240] sm:$0xff]
    %v1082 = vld [vmem:[#allocation5 + $0x248] sm:$0xf]
    %v1083 = vld [vmem:[#allocation5 + $0x24c] sm:$0xff]
    %v1084 = vld [vmem:[#allocation5 + $0x254] sm:$0xf]
    %v1085 = vld [vmem:[#allocation5 + $0x258] sm:$0xff]
    %v1086 = vld [vmem:[#allocation5 + $0x260] sm:$0xf]
    %v1087 = vld [vmem:[#allocation5 + $0x264] sm:$0xff]
    %v1088 = vld [vmem:[#allocation5 + $0x26c] sm:$0xf]
    %v1089 = vld [vmem:[#allocation5 + $0x270] sm:$0xff]
    %v1090 = vld [vmem:[#allocation5 + $0x278] sm:$0xf]
    %v1091 = vld [vmem:[#allocation5 + $0x27c] sm:$0xff]
    %v1092 = vld [vmem:[#allocation5 + $0x284] sm:$0xf]
    %v1093 = vld [vmem:[#allocation5 + $0x288] sm:$0xff]
    %v1094 = vld [vmem:[#allocation5 + $0x290] sm:$0xf]
    %v1095 = vld [vmem:[#allocation5 + $0x294] sm:$0xff]
    %v1096 = vld [vmem:[#allocation5 + $0x29c] sm:$0xf]
    %v1097 = vld [vmem:[#allocation5 + $0x2a0] sm:$0xff]
    %v1098 = vld [vmem:[#allocation5 + $0x2a8] sm:$0xf]
    %v1099 = vld [vmem:[#allocation5 + $0x2ac] sm:$0xff]
    %v1100 = vld [vmem:[#allocation5 + $0x2b4] sm:$0xf]
    %v1101 = vld [vmem:[#allocation5 + $0x2b8] sm:$0xff]
    %v1102 = vld [vmem:[#allocation5 + $0x2c0] sm:$0xf]
    %v1103 = vld [vmem:[#allocation5 + $0x2c4] sm:$0xff]
    %v1104 = vld [vmem:[#allocation5 + $0x2cc] sm:$0xf]
    %v1105 = vld [vmem:[#allocation5 + $0x2d0] sm:$0xff]
    %v1106 = vld [vmem:[#allocation5 + $0x2d8] sm:$0xf]
    %v1107 = vld [vmem:[#allocation5 + $0x2dc] sm:$0xff]
    %v1108 = vld [vmem:[#allocation5 + $0x2e4] sm:$0xf]
    %v1109 = vld [vmem:[#allocation5 + $0x2e8] sm:$0xff]
    %v1110 = vld [vmem:[#allocation5 + $0x2f0] sm:$0xf]
    %v1111 = vld [vmem:[#allocation5 + $0x2f4] sm:$0xff]
    %v1112 = vld [vmem:[#allocation5 + $0x2fc] sm:$0xf]
    %v1241 = vunpack.c.l.b16 %v985
    %v1242 = vunpack.c.h.b16 %v985
    %v1243 = vunpack.c.l.b16 %v986
    %v1244 = vunpack.c.l.b16 %v987
    %v1245 = vunpack.c.h.b16 %v987
    %v1246 = vunpack.c.l.b16 %v988
    %v1247 = vunpack.c.l.b16 %v989
    %v1248 = vunpack.c.h.b16 %v989
    %v1249 = vunpack.c.l.b16 %v990
    %v1250 = vunpack.c.l.b16 %v991
    %v1251 = vunpack.c.h.b16 %v991
    %v1252 = vunpack.c.l.b16 %v992
    %v1253 = vunpack.c.l.b16 %v993
    %v1254 = vunpack.c.h.b16 %v993
    %v1255 = vunpack.c.l.b16 %v994
    %v1256 = vunpack.c.l.b16 %v995
    %v1257 = vunpack.c.h.b16 %v995
    %v1258 = vunpack.c.l.b16 %v996
    %v1259 = vunpack.c.l.b16 %v997
    %v1260 = vunpack.c.h.b16 %v997
    %v1261 = vunpack.c.l.b16 %v998
    %v1262 = vunpack.c.l.b16 %v999
    %v1263 = vunpack.c.h.b16 %v999
    %v1264 = vunpack.c.l.b16 %v1000
    %v1265 = vunpack.c.l.b16 %v1001
    %v1266 = vunpack.c.h.b16 %v1001
    %v1267 = vunpack.c.l.b16 %v1002
    %v1268 = vunpack.c.l.b16 %v1003
    %v1269 = vunpack.c.h.b16 %v1003
    %v1270 = vunpack.c.l.b16 %v1004
    %v1271 = vunpack.c.l.b16 %v1005
    %v1272 = vunpack.c.h.b16 %v1005
    %v1273 = vunpack.c.l.b16 %v1006
    %v1274 = vunpack.c.l.b16 %v1007
    %v1275 = vunpack.c.h.b16 %v1007
    %v1276 = vunpack.c.l.b16 %v1008
    %v1277 = vunpack.c.l.b16 %v1009
    %v1278 = vunpack.c.h.b16 %v1009
    %v1279 = vunpack.c.l.b16 %v1010
    %v1280 = vunpack.c.l.b16 %v1011
    %v1281 = vunpack.c.h.b16 %v1011
    %v1282 = vunpack.c.l.b16 %v1012
    %v1283 = vunpack.c.l.b16 %v1013
    %v1284 = vunpack.c.h.b16 %v1013
    %v1285 = vunpack.c.l.b16 %v1014
    %v1286 = vunpack.c.l.b16 %v1015
    %v1287 = vunpack.c.h.b16 %v1015
    %v1288 = vunpack.c.l.b16 %v1016
    %v1289 = vunpack.c.l.b16 %v1017
    %v1290 = vunpack.c.h.b16 %v1017
    %v1291 = vunpack.c.l.b16 %v1018
    %v1292 = vunpack.c.l.b16 %v1019
    %v1293 = vunpack.c.h.b16 %v1019
    %v1294 = vunpack.c.l.b16 %v1020
    %v1295 = vunpack.c.l.b16 %v1021
    %v1296 = vunpack.c.h.b16 %v1021
    %v1297 = vunpack.c.l.b16 %v1022
    %v1298 = vunpack.c.l.b16 %v1023
    %v1299 = vunpack.c.h.b16 %v1023
    %v1300 = vunpack.c.l.b16 %v1024
    %v1301 = vunpack.c.l.b16 %v1025
    %v1302 = vunpack.c.h.b16 %v1025
    %v1303 = vunpack.c.l.b16 %v1026
    %v1304 = vunpack.c.l.b16 %v1027
    %v1305 = vunpack.c.h.b16 %v1027
    %v1306 = vunpack.c.l.b16 %v1028
    %v1307 = vunpack.c.l.b16 %v1029
    %v1308 = vunpack.c.h.b16 %v1029
    %v1309 = vunpack.c.l.b16 %v1030
    %v1310 = vunpack.c.l.b16 %v1031
    %v1311 = vunpack.c.h.b16 %v1031
    %v1312 = vunpack.c.l.b16 %v1032
    %v1313 = vunpack.c.l.b16 %v1033
    %v1314 = vunpack.c.h.b16 %v1033
    %v1315 = vunpack.c.l.b16 %v1034
    %v1316 = vunpack.c.l.b16 %v1035
    %v1317 = vunpack.c.h.b16 %v1035
    %v1318 = vunpack.c.l.b16 %v1036
    %v1319 = vunpack.c.l.b16 %v1037
    %v1320 = vunpack.c.h.b16 %v1037
    %v1321 = vunpack.c.l.b16 %v1038
    %v1322 = vunpack.c.l.b16 %v1039
    %v1323 = vunpack.c.h.b16 %v1039
    %v1324 = vunpack.c.l.b16 %v1040
    %v1325 = vunpack.c.l.b16 %v1041
    %v1326 = vunpack.c.h.b16 %v1041
    %v1327 = vunpack.c.l.b16 %v1042
    %v1328 = vunpack.c.l.b16 %v1043
    %v1329 = vunpack.c.h.b16 %v1043
    %v1330 = vunpack.c.l.b16 %v1044
    %v1331 = vunpack.c.l.b16 %v1045
    %v1332 = vunpack.c.h.b16 %v1045
    %v1333 = vunpack.c.l.b16 %v1046
    %v1334 = vunpack.c.l.b16 %v1047
    %v1335 = vunpack.c.h.b16 %v1047
    %v1336 = vunpack.c.l.b16 %v1048
    %v1337 = vunpack.c.l.b16 %v1049
    %v1338 = vunpack.c.h.b16 %v1049
    %v1339 = vunpack.c.l.b16 %v1050
    %v1340 = vunpack.c.l.b16 %v1051
    %v1341 = vunpack.c.h.b16 %v1051
    %v1342 = vunpack.c.l.b16 %v1052
    %v1343 = vunpack.c.l.b16 %v1053
    %v1344 = vunpack.c.h.b16 %v1053
    %v1345 = vunpack.c.l.b16 %v1054
    %v1346 = vunpack.c.l.b16 %v1055
    %v1347 = vunpack.c.h.b16 %v1055
    %v1348 = vunpack.c.l.b16 %v1056
    %v1349 = vunpack.c.l.b16 %v1057
    %v1350 = vunpack.c.h.b16 %v1057
    %v1351 = vunpack.c.l.b16 %v1058
    %v1352 = vunpack.c.l.b16 %v1059
    %v1353 = vunpack.c.h.b16 %v1059
    %v1354 = vunpack.c.l.b16 %v1060
    %v1355 = vunpack.c.l.b16 %v1061
    %v1356 = vunpack.c.h.b16 %v1061
    %v1357 = vunpack.c.l.b16 %v1062
    %v1358 = vunpack.c.l.b16 %v1063
    %v1359 = vunpack.c.h.b16 %v1063
    %v1360 = vunpack.c.l.b16 %v1064
    %v1361 = vunpack.c.l.b16 %v1065
    %v1362 = vunpack.c.h.b16 %v1065
    %v1363 = vunpack.c.l.b16 %v1066
    %v1364 = vunpack.c.l.b16 %v1067
    %v1365 = vunpack.c.h.b16 %v1067
    %v1366 = vunpack.c.l.b16 %v1068
    %v1367 = vunpack.c.l.b16 %v1069
    %v1368 = vunpack.c.h.b16 %v1069
    %v1369 = vunpack.c.l.b16 %v1070
    %v1370 = vunpack.c.l.b16 %v1071
    %v1371 = vunpack.c.h.b16 %v1071
    %v1372 = vunpack.c.l.b16 %v1072
    %v1373 = vunpack.c.l.b16 %v1073
    %v1374 = vunpack.c.h.b16 %v1073
    %v1375 = vunpack.c.l.b16 %v1074
    %v1376 = vunpack.c.l.b16 %v1075
    %v1377 = vunpack.c.h.b16 %v1075
    %v1378 = vunpack.c.l.b16 %v1076
    %v1379 = vunpack.c.l.b16 %v1077
    %v1380 = vunpack.c.h.b16 %v1077
    %v1381 = vunpack.c.l.b16 %v1078
    %v1382 = vunpack.c.l.b16 %v1079
    %v1383 = vunpack.c.h.b16 %v1079
    %v1384 = vunpack.c.l.b16 %v1080
    %v1385 = vunpack.c.l.b16 %v1081
    %v1386 = vunpack.c.h.b16 %v1081
    %v1387 = vunpack.c.l.b16 %v1082
    %v1388 = vunpack.c.l.b16 %v1083
    %v1389 = vunpack.c.h.b16 %v1083
    %v1390 = vunpack.c.l.b16 %v1084
    %v1391 = vunpack.c.l.b16 %v1085
    %v1392 = vunpack.c.h.b16 %v1085
    %v1393 = vunpack.c.l.b16 %v1086
    %v1394 = vunpack.c.l.b16 %v1087
    %v1395 = vunpack.c.h.b16 %v1087
    %v1396 = vunpack.c.l.b16 %v1088
    %v1397 = vunpack.c.l.b16 %v1089
    %v1398 = vunpack.c.h.b16 %v1089
    %v1399 = vunpack.c.l.b16 %v1090
    %v1400 = vunpack.c.l.b16 %v1091
    %v1401 = vunpack.c.h.b16 %v1091
    %v1402 = vunpack.c.l.b16 %v1092
    %v1403 = vunpack.c.l.b16 %v1093
    %v1404 = vunpack.c.h.b16 %v1093
    %v1405 = vunpack.c.l.b16 %v1094
    %v1406 = vunpack.c.l.b16 %v1095
    %v1407 = vunpack.c.h.b16 %v1095
    %v1408 = vunpack.c.l.b16 %v1096
    %v1409 = vunpack.c.l.b16 %v1097
    %v1410 = vunpack.c.h.b16 %v1097
    %v1411 = vunpack.c.l.b16 %v1098
    %v1412 = vunpack.c.l.b16 %v1099
    %v1413 = vunpack.c.h.b16 %v1099
    %v1414 = vunpack.c.l.b16 %v1100
    %v1415 = vunpack.c.l.b16 %v1101
    %v1416 = vunpack.c.h.b16 %v1101
    %v1417 = vunpack.c.l.b16 %v1102
    %v1418 = vunpack.c.l.b16 %v1103
    %v1419 = vunpack.c.h.b16 %v1103
    %v1420 = vunpack.c.l.b16 %v1104
    %v1421 = vunpack.c.l.b16 %v1105
    %v1422 = vunpack.c.h.b16 %v1105
    %v1423 = vunpack.c.l.b16 %v1106
    %v1424 = vunpack.c.l.b16 %v1107
    %v1425 = vunpack.c.h.b16 %v1107
    %v1426 = vunpack.c.l.b16 %v1108
    %v1427 = vunpack.c.l.b16 %v1109
    %v1428 = vunpack.c.h.b16 %v1109
    %v1429 = vunpack.c.l.b16 %v1110
    %v1430 = vunpack.c.l.b16 %v1111
    %v1431 = vunpack.c.h.b16 %v1111
    %v1432 = vunpack.c.l.b16 %v1112
    %v1433 = vpack.c.b16 %v1244, %v1241
    %v1434 = vpack.c.b16 %v1245, %v1242
    %v1435 = vpack.c.b16 %v1246, %v1243
    %v1436 = vpack.c.b16 %v1250, %v1247
    %v1437 = vpack.c.b16 %v1251, %v1248
    %v1438 = vpack.c.b16 %v1252, %v1249
    %v1439 = vpack.c.b16 %v1256, %v1253
    %v1440 = vpack.c.b16 %v1257, %v1254
    %v1441 = vpack.c.b16 %v1258, %v1255
    %v1442 = vpack.c.b16 %v1262, %v1259
    %v1443 = vpack.c.b16 %v1263, %v1260
    %v1444 = vpack.c.b16 %v1264, %v1261
    %v1445 = vpack.c.b16 %v1268, %v1265
    %v1446 = vpack.c.b16 %v1269, %v1266
    %v1447 = vpack.c.b16 %v1270, %v1267
    %v1448 = vpack.c.b16 %v1274, %v1271
    %v1449 = vpack.c.b16 %v1275, %v1272
    %v1450 = vpack.c.b16 %v1276, %v1273
    %v1451 = vpack.c.b16 %v1280, %v1277
    %v1452 = vpack.c.b16 %v1281, %v1278
    %v1453 = vpack.c.b16 %v1282, %v1279
    %v1454 = vpack.c.b16 %v1286, %v1283
    %v1455 = vpack.c.b16 %v1287, %v1284
    %v1456 = vpack.c.b16 %v1288, %v1285
    %v1457 = vpack.c.b16 %v1292, %v1289
    %v1458 = vpack.c.b16 %v1293, %v1290
    %v1459 = vpack.c.b16 %v1294, %v1291
    %v1460 = vpack.c.b16 %v1298, %v1295
    %v1461 = vpack.c.b16 %v1299, %v1296
    %v1462 = vpack.c.b16 %v1300, %v1297
    %v1463 = vpack.c.b16 %v1304, %v1301
    %v1464 = vpack.c.b16 %v1305, %v1302
    %v1465 = vpack.c.b16 %v1306, %v1303
    %v1466 = vpack.c.b16 %v1310, %v1307
    %v1467 = vpack.c.b16 %v1311, %v1308
    %v1468 = vpack.c.b16 %v1312, %v1309
    %v1469 = vpack.c.b16 %v1316, %v1313
    %v1470 = vpack.c.b16 %v1317, %v1314
    %v1471 = vpack.c.b16 %v1318, %v1315
    %v1472 = vpack.c.b16 %v1322, %v1319
    %v1473 = vpack.c.b16 %v1323, %v1320
    %v1474 = vpack.c.b16 %v1324, %v1321
    %v1475 = vpack.c.b16 %v1328, %v1325
    %v1476 = vpack.c.b16 %v1329, %v1326
    %v1477 = vpack.c.b16 %v1330, %v1327
    %v1478 = vpack.c.b16 %v1334, %v1331
    %v1479 = vpack.c.b16 %v1335, %v1332
    %v1480 = vpack.c.b16 %v1336, %v1333
    %v1481 = vpack.c.b16 %v1340, %v1337
    %v1482 = vpack.c.b16 %v1341, %v1338
    %v1483 = vpack.c.b16 %v1342, %v1339
    %v1484 = vpack.c.b16 %v1346, %v1343
    %v1485 = vpack.c.b16 %v1347, %v1344
    %v1486 = vpack.c.b16 %v1348, %v1345
    %v1487 = vpack.c.b16 %v1352, %v1349
    %v1488 = vpack.c.b16 %v1353, %v1350
    %v1489 = vpack.c.b16 %v1354, %v1351
    %v1490 = vpack.c.b16 %v1358, %v1355
    %v1491 = vpack.c.b16 %v1359, %v1356
    %v1492 = vpack.c.b16 %v1360, %v1357
    %v1493 = vpack.c.b16 %v1364, %v1361
    %v1494 = vpack.c.b16 %v1365, %v1362
    %v1495 = vpack.c.b16 %v1366, %v1363
    %v1496 = vpack.c.b16 %v1370, %v1367
    %v1497 = vpack.c.b16 %v1371, %v1368
    %v1498 = vpack.c.b16 %v1372, %v1369
    %v1499 = vpack.c.b16 %v1376, %v1373
    %v1500 = vpack.c.b16 %v1377, %v1374
    %v1501 = vpack.c.b16 %v1378, %v1375
    %v1502 = vpack.c.b16 %v1382, %v1379
    %v1503 = vpack.c.b16 %v1383, %v1380
    %v1504 = vpack.c.b16 %v1384, %v1381
    %v1505 = vpack.c.b16 %v1388, %v1385
    %v1506 = vpack.c.b16 %v1389, %v1386
    %v1507 = vpack.c.b16 %v1390, %v1387
    %v1508 = vpack.c.b16 %v1394, %v1391
    %v1509 = vpack.c.b16 %v1395, %v1392
    %v1510 = vpack.c.b16 %v1396, %v1393
    %v1511 = vpack.c.b16 %v1400, %v1397
    %v1512 = vpack.c.b16 %v1401, %v1398
    %v1513 = vpack.c.b16 %v1402, %v1399
    %v1514 = vpack.c.b16 %v1406, %v1403
    %v1515 = vpack.c.b16 %v1407, %v1404
    %v1516 = vpack.c.b16 %v1408, %v1405
    %v1517 = vpack.c.b16 %v1412, %v1409
    %v1518 = vpack.c.b16 %v1413, %v1410
    %v1519 = vpack.c.b16 %v1414, %v1411
    %v1520 = vpack.c.b16 %v1418, %v1415
    %v1521 = vpack.c.b16 %v1419, %v1416
    %v1522 = vpack.c.b16 %v1420, %v1417
    %v1523 = vpack.c.b16 %v1424, %v1421
    %v1524 = vpack.c.b16 %v1425, %v1422
    %v1525 = vpack.c.b16 %v1426, %v1423
    %v1526 = vpack.c.b16 %v1430, %v1427
    %v1527 = vpack.c.b16 %v1431, %v1428
    %v1528 = vpack.c.b16 %v1432, %v1429
    %1625 = vmatprep.subr.bf16.mxu0 %v1455
    %1626 = vmatpush1.bf16.msra.mxu0 %v1454
    %1627 = vmatprep.subr.bf16.mxu0 %v1452
    %1628 = vmatpush1.bf16.msra.mxu0 %v1451
    %1629 = vmatprep.subr.bf16.mxu0 %v1449
    %1630 = vmatpush1.bf16.msra.mxu0 %v1448
    %1631 = vmatprep.subr.bf16.mxu0 %v1446
    %1632 = vmatpush1.bf16.msra.mxu0 %v1445
    %1633 = vmatprep.subr.bf16.mxu0 %v1443
    %1634 = vmatpush1.bf16.msra.mxu0 %v1442
    %1635 = vmatprep.subr.bf16.mxu0 %v1440
    %1636 = vmatpush1.bf16.msra.mxu0 %v1439
    %1637 = vmatprep.subr.bf16.mxu0 %v1437
    %1638 = vmatpush1.bf16.msra.mxu0 %v1436
    %1639 = vmatprep.subr.bf16.mxu0 %v1434
    %1640 = vmatpush1.bf16.msra.mxu0 %v1433
    %1641 = vmatprep.subr.bf16.mxu0 %v1479
    %1642 = vmatpush2.bf16.msra.mxu0 %v1478
    %1643 = vmatprep.subr.bf16.mxu0 %v1476
    %1644 = vmatpush2.bf16.msra.mxu0 %v1475
    %1645 = vmatprep.subr.bf16.mxu0 %v1473
    %1646 = vmatpush2.bf16.msra.mxu0 %v1472
    %1647 = vmatprep.subr.bf16.mxu0 %v1470
    %1648 = vmatpush2.bf16.msra.mxu0 %v1469
    %1649 = vmatprep.subr.bf16.mxu0 %v1467
    %1650 = vmatpush2.bf16.msra.mxu0 %v1466
    %1651 = vmatprep.subr.bf16.mxu0 %v1464
    %1652 = vmatpush2.bf16.msra.mxu0 %v1463
    %1653 = vmatprep.subr.bf16.mxu0 %v1461
    %1654 = vmatpush2.bf16.msra.mxu0 %v1460
    %1655 = vmatprep.subr.bf16.mxu0 %v1458
    %1656 = vmatpush2.bf16.msra.mxu0 %v1457
    %1657 = vmatprep.mubr.bf16.mxu0 %v910
    %1658 = vmatmul.mubr.bf16.gmra.mxu0 %v909
    %v1659 = vpop.f32.mrf.mxu0
    %v1660 = vadd.f32 0.0, %v1659
    %v1661 = vpop.f32.mrf.mxu0
    %v1662 = vadd.f32 0.0, %v1661
    %v1663 = vpop.f32.mrf.mxu0
    %v1664 = vadd.f32 0.0, %v1663
    %v1665 = vpop.f32.mrf.mxu0
    %v1666 = vadd.f32 0.0, %v1665
    %1667 = vmatprep.mubr.bf16.mxu0 %v914
    %1668 = vmatmul.mubr.bf16.gmra.mxu0 %v913
    %v1669 = vpop.f32.mrf.mxu0
    %v1670 = vadd.f32 0.0, %v1669
    %v1671 = vpop.f32.mrf.mxu0
    %v1672 = vadd.f32 0.0, %v1671
    %v1673 = vpop.f32.mrf.mxu0
    %v1674 = vadd.f32 0.0, %v1673
    %v1675 = vpop.f32.mrf.mxu0
    %v1676 = vadd.f32 0.0, %v1675
    %1677 = vmatprep.mubr.bf16.mxu0 %v918
    %1678 = vmatmul.mubr.bf16.gmra.mxu0 %v917
    %v1679 = vpop.f32.mrf.mxu0
    %v1680 = vadd.f32 0.0, %v1679
    %v1681 = vpop.f32.mrf.mxu0
    %v1682 = vadd.f32 0.0, %v1681
    %v1683 = vpop.f32.mrf.mxu0
    %v1684 = vadd.f32 0.0, %v1683
    %v1685 = vpop.f32.mrf.mxu0
    %v1686 = vadd.f32 0.0, %v1685
    %1687 = vmatprep.mubr.bf16.mxu0 %v922
    %1688 = vmatmul.mubr.bf16.gmra.mxu0 %v921
    %v1689 = vpop.f32.mrf.mxu0
    %v1690 = vadd.f32 0.0, %v1689
    %v1691 = vpop.f32.mrf.mxu0
    %v1692 = vadd.f32 0.0, %v1691
    %v1693 = vpop.f32.mrf.mxu0
    %v1694 = vadd.f32 0.0, %v1693
    %v1695 = vpop.f32.mrf.mxu0
    %v1696 = vadd.f32 0.0, %v1695
    %1697 = vmatprep.mubr.bf16.mxu0 %v926
    %1698 = vmatmul.mubr.bf16.gmra.mxu0 %v925
    %v1699 = vpop.f32.mrf.mxu0
    %v1700 = vadd.f32 0.0, %v1699
    %v1701 = vpop.f32.mrf.mxu0
    %v1702 = vadd.f32 0.0, %v1701
    %v1703 = vpop.f32.mrf.mxu0
    %v1704 = vadd.f32 0.0, %v1703
    %v1705 = vpop.f32.mrf.mxu0
    %v1706 = vadd.f32 0.0, %v1705
    %1707 = vmatprep.mubr.bf16.mxu0 %v930
    %1708 = vmatmul.mubr.bf16.gmra.mxu0 %v929
    %v1709 = vpop.f32.mrf.mxu0
    %v1710 = vadd.f32 0.0, %v1709
    %v1711 = vpop.f32.mrf.mxu0
    %v1712 = vadd.f32 0.0, %v1711
    %v1713 = vpop.f32.mrf.mxu0
    %v1714 = vadd.f32 0.0, %v1713
    %v1715 = vpop.f32.mrf.mxu0
    %v1716 = vadd.f32 0.0, %v1715
    %1717 = vmatprep.mubr.bf16.mxu0 %v934
    %1718 = vmatmul.mubr.bf16.gmra.mxu0 %v933
    %v1719 = vpop.f32.mrf.mxu0
    %v1720 = vadd.f32 0.0, %v1719
    %v1721 = vpop.f32.mrf.mxu0
    %v1722 = vadd.f32 0.0, %v1721
    %v1723 = vpop.f32.mrf.mxu0
    %v1724 = vadd.f32 0.0, %v1723
    %v1725 = vpop.f32.mrf.mxu0
    %v1726 = vadd.f32 0.0, %v1725
    %1727 = vmatprep.mubr.bf16.mxu0 %v938
    %1728 = vmatmul.mubr.bf16.gmra.mxu0 %v937
    %v1729 = vpop.f32.mrf.mxu0
    %v1730 = vadd.f32 0.0, %v1729
    %v1731 = vpop.f32.mrf.mxu0
    %v1732 = vadd.f32 0.0, %v1731
    %v1733 = vpop.f32.mrf.mxu0
    %v1734 = vadd.f32 0.0, %v1733
    %v1735 = vpop.f32.mrf.mxu0
    %v1736 = vadd.f32 0.0, %v1735
    %1737 = vmatprep.mubr.bf16.mxu0 %v942
    %1738 = vmatmul.mubr.bf16.gmra.mxu0 %v941
    %v1739 = vpop.f32.mrf.mxu0
    %v1740 = vadd.f32 0.0, %v1739
    %v1741 = vpop.f32.mrf.mxu0
    %v1742 = vadd.f32 0.0, %v1741
    %v1743 = vpop.f32.mrf.mxu0
    %v1744 = vadd.f32 0.0, %v1743
    %v1745 = vpop.f32.mrf.mxu0
    %v1746 = vadd.f32 0.0, %v1745
    %1747 = vmatprep.mubr.bf16.mxu0 %v946
    %1748 = vmatmul.mubr.bf16.gmra.mxu0 %v945
    %v1749 = vpop.f32.mrf.mxu0
    %v1750 = vadd.f32 0.0, %v1749
    %v1751 = vpop.f32.mrf.mxu0
    %v1752 = vadd.f32 0.0, %v1751
    %v1753 = vpop.f32.mrf.mxu0
    %v1754 = vadd.f32 0.0, %v1753
    %v1755 = vpop.f32.mrf.mxu0
    %v1756 = vadd.f32 0.0, %v1755
    %1757 = vmatprep.mubr.bf16.mxu0 %v950
    %1758 = vmatmul.mubr.bf16.gmra.mxu0 %v949
    %v1759 = vpop.f32.mrf.mxu0
    %v1760 = vadd.f32 0.0, %v1759
    %v1761 = vpop.f32.mrf.mxu0
    %v1762 = vadd.f32 0.0, %v1761
    %v1763 = vpop.f32.mrf.mxu0
    %v1764 = vadd.f32 0.0, %v1763
    %v1765 = vpop.f32.mrf.mxu0
    %v1766 = vadd.f32 0.0, %v1765
    %1767 = vmatprep.mubr.bf16.mxu0 %v954
    %1768 = vmatmul.mubr.bf16.gmra.mxu0 %v953
    %v1769 = vpop.f32.mrf.mxu0
    %v1770 = vadd.f32 0.0, %v1769
    %v1771 = vpop.f32.mrf.mxu0
    %v1772 = vadd.f32 0.0, %v1771
    %v1773 = vpop.f32.mrf.mxu0
    %v1774 = vadd.f32 0.0, %v1773
    %v1775 = vpop.f32.mrf.mxu0
    %v1776 = vadd.f32 0.0, %v1775
    %1777 = vmatprep.mubr.bf16.mxu0 %v958
    %1778 = vmatmul.mubr.bf16.gmra.mxu0 %v957
    %v1779 = vpop.f32.mrf.mxu0
    %v1780 = vadd.f32 0.0, %v1779
    %v1781 = vpop.f32.mrf.mxu0
    %v1782 = vadd.f32 0.0, %v1781
    %v1783 = vpop.f32.mrf.mxu0
    %v1784 = vadd.f32 0.0, %v1783
    %v1785 = vpop.f32.mrf.mxu0
    %v1786 = vadd.f32 0.0, %v1785
    %1787 = vmatprep.mubr.bf16.mxu0 %v962
    %1788 = vmatmul.mubr.bf16.gmra.mxu0 %v961
    %v1789 = vpop.f32.mrf.mxu0
    %v1790 = vadd.f32 0.0, %v1789
    %v1791 = vpop.f32.mrf.mxu0
    %v1792 = vadd.f32 0.0, %v1791
    %v1793 = vpop.f32.mrf.mxu0
    %v1794 = vadd.f32 0.0, %v1793
    %v1795 = vpop.f32.mrf.mxu0
    %v1796 = vadd.f32 0.0, %v1795
    %1797 = vmatprep.mubr.bf16.mxu0 %v966
    %1798 = vmatmul.mubr.bf16.gmra.mxu0 %v965
    %v1799 = vpop.f32.mrf.mxu0
    %v1800 = vadd.f32 0.0, %v1799
    %v1801 = vpop.f32.mrf.mxu0
    %v1802 = vadd.f32 0.0, %v1801
    %v1803 = vpop.f32.mrf.mxu0
    %v1804 = vadd.f32 0.0, %v1803
    %v1805 = vpop.f32.mrf.mxu0
    %v1806 = vadd.f32 0.0, %v1805
    %1807 = vmatprep.mubr.bf16.mxu0 %v970
    %1808 = vmatmul.mubr.bf16.gmra.mxu0 %v969
    %v1809 = vpop.f32.mrf.mxu0
    %v1810 = vadd.f32 0.0, %v1809
    %v1811 = vpop.f32.mrf.mxu0
    %v1812 = vadd.f32 0.0, %v1811
    %v1813 = vpop.f32.mrf.mxu0
    %v1814 = vadd.f32 0.0, %v1813
    %v1815 = vpop.f32.mrf.mxu0
    %v1816 = vadd.f32 0.0, %v1815
    %1817 = vmatprep.mubr.bf16.mxu0 %v974
    %1818 = vmatmul.mubr.bf16.gmra.mxu0 %v973
    %v1819 = vpop.f32.mrf.mxu0
    %v1820 = vadd.f32 0.0, %v1819
    %v1821 = vpop.f32.mrf.mxu0
    %v1822 = vadd.f32 0.0, %v1821
    %v1823 = vpop.f32.mrf.mxu0
    %v1824 = vadd.f32 0.0, %v1823
    %v1825 = vpop.f32.mrf.mxu0
    %v1826 = vadd.f32 0.0, %v1825
    %1827 = vmatprep.mubr.bf16.mxu0 %v978
    %1828 = vmatmul.mubr.bf16.gmra.mxu0 %v977
    %v1829 = vpop.f32.mrf.mxu0
    %v1830 = vadd.f32 0.0, %v1829
    %v1831 = vpop.f32.mrf.mxu0
    %v1832 = vadd.f32 0.0, %v1831
    %v1833 = vpop.f32.mrf.mxu0
    %v1834 = vadd.f32 0.0, %v1833
    %v1835 = vpop.f32.mrf.mxu0
    %v1836 = vadd.f32 0.0, %v1835
    %1837 = vmatprep.mubr.bf16.mxu0 %v982
    %1838 = vmatmul.mubr.bf16.gmra.mxu0 %v981
    %v1839 = vpop.f32.mrf.mxu0
    %v1840 = vadd.f32 0.0, %v1839
    %v1841 = vpop.f32.mrf.mxu0
    %v1842 = vadd.f32 0.0, %v1841
    %v1843 = vpop.f32.mrf.mxu0
    %v1844 = vadd.f32 0.0, %v1843
    %v1845 = vpop.f32.mrf.mxu0
    %v1846 = vadd.f32 0.0, %v1845
    %1847 = vdwg.mxu0
    %1848 = vmatprep.subr.bf16.mxu0 %v1503
    %1849 = vmatpush1.bf16.msra.mxu0 %v1502
    %1850 = vmatprep.subr.bf16.mxu0 %v1500
    %1851 = vmatpush1.bf16.msra.mxu0 %v1499
    %1852 = vmatprep.subr.bf16.mxu0 %v1497
    %1853 = vmatpush1.bf16.msra.mxu0 %v1496
    %1854 = vmatprep.subr.bf16.mxu0 %v1494
    %1855 = vmatpush1.bf16.msra.mxu0 %v1493
    %1856 = vmatprep.subr.bf16.mxu0 %v1491
    %1857 = vmatpush1.bf16.msra.mxu0 %v1490
    %1858 = vmatprep.subr.bf16.mxu0 %v1488
    %1859 = vmatpush1.bf16.msra.mxu0 %v1487
    %1860 = vmatprep.subr.bf16.mxu0 %v1485
    %1861 = vmatpush1.bf16.msra.mxu0 %v1484
    %1862 = vmatprep.subr.bf16.mxu0 %v1482
    %1863 = vmatpush1.bf16.msra.mxu0 %v1481
    %1864 = vmatprep.subr.bf16.mxu0 %v1527
    %1865 = vmatpush2.bf16.msra.mxu0 %v1526
    %1866 = vmatprep.subr.bf16.mxu0 %v1524
    %1867 = vmatpush2.bf16.msra.mxu0 %v1523
    %1868 = vmatprep.subr.bf16.mxu0 %v1521
    %1869 = vmatpush2.bf16.msra.mxu0 %v1520
    %1870 = vmatprep.subr.bf16.mxu0 %v1518
    %1871 = vmatpush2.bf16.msra.mxu0 %v1517
    %1872 = vmatprep.subr.bf16.mxu0 %v1515
    %1873 = vmatpush2.bf16.msra.mxu0 %v1514
    %1874 = vmatprep.subr.bf16.mxu0 %v1512
    %1875 = vmatpush2.bf16.msra.mxu0 %v1511
    %1876 = vmatprep.subr.bf16.mxu0 %v1509
    %1877 = vmatpush2.bf16.msra.mxu0 %v1508
    %1878 = vmatprep.subr.bf16.mxu0 %v1506
    %1879 = vmatpush2.bf16.msra.mxu0 %v1505
    %1880 = vmatprep.mubr.bf16.mxu0 %v912
    %1881 = vmatmul.mubr.bf16.gmra.mxu0 %v911
    %v1882 = vpop.f32.mrf.mxu0
    %v1883 = vadd.f32 %v1660, %v1882
    %v1884 = vpop.f32.mrf.mxu0
    %v1885 = vadd.f32 %v1662, %v1884
    %v1886 = vpop.f32.mrf.mxu0
    %v1887 = vadd.f32 %v1664, %v1886
    %v1888 = vpop.f32.mrf.mxu0
    %v1889 = vadd.f32 %v1666, %v1888
    %1890 = vmatprep.mubr.bf16.mxu0 %v916
    %1891 = vmatmul.mubr.bf16.gmra.mxu0 %v915
    %v1892 = vpop.f32.mrf.mxu0
    %v1893 = vadd.f32 %v1670, %v1892
    %v1894 = vpop.f32.mrf.mxu0
    %v1895 = vadd.f32 %v1672, %v1894
    %v1896 = vpop.f32.mrf.mxu0
    %v1897 = vadd.f32 %v1674, %v1896
    %v1898 = vpop.f32.mrf.mxu0
    %v1899 = vadd.f32 %v1676, %v1898
    %1900 = vmatprep.mubr.bf16.mxu0 %v920
    %1901 = vmatmul.mubr.bf16.gmra.mxu0 %v919
    %v1902 = vpop.f32.mrf.mxu0
    %v1903 = vadd.f32 %v1680, %v1902
    %v1904 = vpop.f32.mrf.mxu0
    %v1905 = vadd.f32 %v1682, %v1904
    %v1906 = vpop.f32.mrf.mxu0
    %v1907 = vadd.f32 %v1684, %v1906
    %v1908 = vpop.f32.mrf.mxu0
    %v1909 = vadd.f32 %v1686, %v1908
    %1910 = vmatprep.mubr.bf16.mxu0 %v924
    %1911 = vmatmul.mubr.bf16.gmra.mxu0 %v923
    %v1912 = vpop.f32.mrf.mxu0
    %v1913 = vadd.f32 %v1690, %v1912
    %v1914 = vpop.f32.mrf.mxu0
    %v1915 = vadd.f32 %v1692, %v1914
    %v1916 = vpop.f32.mrf.mxu0
    %v1917 = vadd.f32 %v1694, %v1916
    %v1918 = vpop.f32.mrf.mxu0
    %v1919 = vadd.f32 %v1696, %v1918
    %1920 = vmatprep.mubr.bf16.mxu0 %v928
    %1921 = vmatmul.mubr.bf16.gmra.mxu0 %v927
    %v1922 = vpop.f32.mrf.mxu0
    %v1923 = vadd.f32 %v1700, %v1922
    %v1924 = vpop.f32.mrf.mxu0
    %v1925 = vadd.f32 %v1702, %v1924
    %v1926 = vpop.f32.mrf.mxu0
    %v1927 = vadd.f32 %v1704, %v1926
    %v1928 = vpop.f32.mrf.mxu0
    %v1929 = vadd.f32 %v1706, %v1928
    %1930 = vmatprep.mubr.bf16.mxu0 %v932
    %1931 = vmatmul.mubr.bf16.gmra.mxu0 %v931
    %v1932 = vpop.f32.mrf.mxu0
    %v1933 = vadd.f32 %v1710, %v1932
    %v1934 = vpop.f32.mrf.mxu0
    %v1935 = vadd.f32 %v1712, %v1934
    %v1936 = vpop.f32.mrf.mxu0
    %v1937 = vadd.f32 %v1714, %v1936
    %v1938 = vpop.f32.mrf.mxu0
    %v1939 = vadd.f32 %v1716, %v1938
    %1940 = vmatprep.mubr.bf16.mxu0 %v936
    %1941 = vmatmul.mubr.bf16.gmra.mxu0 %v935
    %v1942 = vpop.f32.mrf.mxu0
    %v1943 = vadd.f32 %v1720, %v1942
    %v1944 = vpop.f32.mrf.mxu0
    %v1945 = vadd.f32 %v1722, %v1944
    %v1946 = vpop.f32.mrf.mxu0
    %v1947 = vadd.f32 %v1724, %v1946
    %v1948 = vpop.f32.mrf.mxu0
    %v1949 = vadd.f32 %v1726, %v1948
    %1950 = vmatprep.mubr.bf16.mxu0 %v940
    %1951 = vmatmul.mubr.bf16.gmra.mxu0 %v939
    %v1952 = vpop.f32.mrf.mxu0
    %v1953 = vadd.f32 %v1730, %v1952
    %v1954 = vpop.f32.mrf.mxu0
    %v1955 = vadd.f32 %v1732, %v1954
    %v1956 = vpop.f32.mrf.mxu0
    %v1957 = vadd.f32 %v1734, %v1956
    %v1958 = vpop.f32.mrf.mxu0
    %v1959 = vadd.f32 %v1736, %v1958
    %1960 = vmatprep.mubr.bf16.mxu0 %v944
    %1961 = vmatmul.mubr.bf16.gmra.mxu0 %v943
    %v1962 = vpop.f32.mrf.mxu0
    %v1963 = vadd.f32 %v1740, %v1962
    %v1964 = vpop.f32.mrf.mxu0
    %v1965 = vadd.f32 %v1742, %v1964
    %v1966 = vpop.f32.mrf.mxu0
    %v1967 = vadd.f32 %v1744, %v1966
    %v1968 = vpop.f32.mrf.mxu0
    %v1969 = vadd.f32 %v1746, %v1968
    %1970 = vmatprep.mubr.bf16.mxu0 %v948
    %1971 = vmatmul.mubr.bf16.gmra.mxu0 %v947
    %v1972 = vpop.f32.mrf.mxu0
    %v1973 = vadd.f32 %v1750, %v1972
    %v1974 = vpop.f32.mrf.mxu0
    %v1975 = vadd.f32 %v1752, %v1974
    %v1976 = vpop.f32.mrf.mxu0
    %v1977 = vadd.f32 %v1754, %v1976
    %v1978 = vpop.f32.mrf.mxu0
    %v1979 = vadd.f32 %v1756, %v1978
    %1980 = vmatprep.mubr.bf16.mxu0 %v952
    %1981 = vmatmul.mubr.bf16.gmra.mxu0 %v951
    %v1982 = vpop.f32.mrf.mxu0
    %v1983 = vadd.f32 %v1760, %v1982
    %v1984 = vpop.f32.mrf.mxu0
    %v1985 = vadd.f32 %v1762, %v1984
    %v1986 = vpop.f32.mrf.mxu0
    %v1987 = vadd.f32 %v1764, %v1986
    %v1988 = vpop.f32.mrf.mxu0
    %v1989 = vadd.f32 %v1766, %v1988
    %1990 = vmatprep.mubr.bf16.mxu0 %v956
    %1991 = vmatmul.mubr.bf16.gmra.mxu0 %v955
    %v1992 = vpop.f32.mrf.mxu0
    %v1993 = vadd.f32 %v1770, %v1992
    %v1994 = vpop.f32.mrf.mxu0
    %v1995 = vadd.f32 %v1772, %v1994
    %v1996 = vpop.f32.mrf.mxu0
    %v1997 = vadd.f32 %v1774, %v1996
    %v1998 = vpop.f32.mrf.mxu0
    %v1999 = vadd.f32 %v1776, %v1998
    %2000 = vmatprep.mubr.bf16.mxu0 %v960
    %2001 = vmatmul.mubr.bf16.gmra.mxu0 %v959
    %v2002 = vpop.f32.mrf.mxu0
    %v2003 = vadd.f32 %v1780, %v2002
    %v2004 = vpop.f32.mrf.mxu0
    %v2005 = vadd.f32 %v1782, %v2004
    %v2006 = vpop.f32.mrf.mxu0
    %v2007 = vadd.f32 %v1784, %v2006
    %v2008 = vpop.f32.mrf.mxu0
    %v2009 = vadd.f32 %v1786, %v2008
    %2010 = vmatprep.mubr.bf16.mxu0 %v964
    %2011 = vmatmul.mubr.bf16.gmra.mxu0 %v963
    %v2012 = vpop.f32.mrf.mxu0
    %v2013 = vadd.f32 %v1790, %v2012
    %v2014 = vpop.f32.mrf.mxu0
    %v2015 = vadd.f32 %v1792, %v2014
    %v2016 = vpop.f32.mrf.mxu0
    %v2017 = vadd.f32 %v1794, %v2016
    %v2018 = vpop.f32.mrf.mxu0
    %v2019 = vadd.f32 %v1796, %v2018
    %2020 = vmatprep.mubr.bf16.mxu0 %v968
    %2021 = vmatmul.mubr.bf16.gmra.mxu0 %v967
    %v2022 = vpop.f32.mrf.mxu0
    %v2023 = vadd.f32 %v1800, %v2022
    %v2024 = vpop.f32.mrf.mxu0
    %v2025 = vadd.f32 %v1802, %v2024
    %v2026 = vpop.f32.mrf.mxu0
    %v2027 = vadd.f32 %v1804, %v2026
    %v2028 = vpop.f32.mrf.mxu0
    %v2029 = vadd.f32 %v1806, %v2028
    %2030 = vmatprep.mubr.bf16.mxu0 %v972
    %2031 = vmatmul.mubr.bf16.gmra.mxu0 %v971
    %v2032 = vpop.f32.mrf.mxu0
    %v2033 = vadd.f32 %v1810, %v2032
    %v2034 = vpop.f32.mrf.mxu0
    %v2035 = vadd.f32 %v1812, %v2034
    %v2036 = vpop.f32.mrf.mxu0
    %v2037 = vadd.f32 %v1814, %v2036
    %v2038 = vpop.f32.mrf.mxu0
    %v2039 = vadd.f32 %v1816, %v2038
    %2040 = vmatprep.mubr.bf16.mxu0 %v976
    %2041 = vmatmul.mubr.bf16.gmra.mxu0 %v975
    %v2042 = vpop.f32.mrf.mxu0
    %v2043 = vadd.f32 %v1820, %v2042
    %v2044 = vpop.f32.mrf.mxu0
    %v2045 = vadd.f32 %v1822, %v2044
    %v2046 = vpop.f32.mrf.mxu0
    %v2047 = vadd.f32 %v1824, %v2046
    %v2048 = vpop.f32.mrf.mxu0
    %v2049 = vadd.f32 %v1826, %v2048
    %2050 = vmatprep.mubr.bf16.mxu0 %v980
    %2051 = vmatmul.mubr.bf16.gmra.mxu0 %v979
    %v2052 = vpop.f32.mrf.mxu0
    %v2053 = vadd.f32 %v1830, %v2052
    %v2054 = vpop.f32.mrf.mxu0
    %v2055 = vadd.f32 %v1832, %v2054
    %v2056 = vpop.f32.mrf.mxu0
    %v2057 = vadd.f32 %v1834, %v2056
    %v2058 = vpop.f32.mrf.mxu0
    %v2059 = vadd.f32 %v1836, %v2058
    %2060 = vmatprep.mubr.bf16.mxu0 %v984
    %2061 = vmatmul.mubr.bf16.gmra.mxu0 %v983
    %v2062 = vpop.f32.mrf.mxu0
    %v2063 = vadd.f32 %v1840, %v2062
    %v2064 = vpop.f32.mrf.mxu0
    %v2065 = vadd.f32 %v1842, %v2064
    %v2066 = vpop.f32.mrf.mxu0
    %v2067 = vadd.f32 %v1844, %v2066
    %v2068 = vpop.f32.mrf.mxu0
    %v2069 = vadd.f32 %v1846, %v2068
    %2070 = vdwg.mxu0
    %2071 = vmatprep.subr.bf16.mxu0 0
    %2072 = vmatpush1.bf16.msra.mxu0 %v1456
    %2073 = vmatprep.subr.bf16.mxu0 0
    %2074 = vmatpush1.bf16.msra.mxu0 %v1453
    %2075 = vmatprep.subr.bf16.mxu0 0
    %2076 = vmatpush1.bf16.msra.mxu0 %v1450
    %2077 = vmatprep.subr.bf16.mxu0 0
    %2078 = vmatpush1.bf16.msra.mxu0 %v1447
    %2079 = vmatprep.subr.bf16.mxu0 0
    %2080 = vmatpush1.bf16.msra.mxu0 %v1444
    %2081 = vmatprep.subr.bf16.mxu0 0
    %2082 = vmatpush1.bf16.msra.mxu0 %v1441
    %2083 = vmatprep.subr.bf16.mxu0 0
    %2084 = vmatpush1.bf16.msra.mxu0 %v1438
    %2085 = vmatprep.subr.bf16.mxu0 0
    %2086 = vmatpush1.bf16.msra.mxu0 %v1435
    %2087 = vmatprep.subr.bf16.mxu0 0
    %2088 = vmatpush2.bf16.msra.mxu0 %v1480
    %2089 = vmatprep.subr.bf16.mxu0 0
    %2090 = vmatpush2.bf16.msra.mxu0 %v1477
    %2091 = vmatprep.subr.bf16.mxu0 0
    %2092 = vmatpush2.bf16.msra.mxu0 %v1474
    %2093 = vmatprep.subr.bf16.mxu0 0
    %2094 = vmatpush2.bf16.msra.mxu0 %v1471
    %2095 = vmatprep.subr.bf16.mxu0 0
    %2096 = vmatpush2.bf16.msra.mxu0 %v1468
    %2097 = vmatprep.subr.bf16.mxu0 0
    %2098 = vmatpush2.bf16.msra.mxu0 %v1465
    %2099 = vmatprep.subr.bf16.mxu0 0
    %2100 = vmatpush2.bf16.msra.mxu0 %v1462
    %2101 = vmatprep.subr.bf16.mxu0 0
    %2102 = vmatpush2.bf16.msra.mxu0 %v1459
    %2103 = vmatprep.mubr.bf16.mxu0 %v910
    %2104 = vmatmul.mubr.bf16.gmra.mxu0 %v909
    %v2105 = vpop.f32.mrf.mxu0
    %v2106 = vadd.f32 0.0, %v2105
    %v2107 = vpop.f32.mrf.mxu0
    %v2108 = vpop.f32.mrf.mxu0
    %v2109 = vadd.f32 0.0, %v2108
    %v2110 = vpop.f32.mrf.mxu0
    %2111 = vmatprep.mubr.bf16.mxu0 %v914
    %2112 = vmatmul.mubr.bf16.gmra.mxu0 %v913
    %v2113 = vpop.f32.mrf.mxu0
    %v2114 = vadd.f32 0.0, %v2113
    %v2115 = vpop.f32.mrf.mxu0
    %v2116 = vpop.f32.mrf.mxu0
    %v2117 = vadd.f32 0.0, %v2116
    %v2118 = vpop.f32.mrf.mxu0
    %2119 = vmatprep.mubr.bf16.mxu0 %v918
    %2120 = vmatmul.mubr.bf16.gmra.mxu0 %v917
    %v2121 = vpop.f32.mrf.mxu0
    %v2122 = vadd.f32 0.0, %v2121
    %v2123 = vpop.f32.mrf.mxu0
    %v2124 = vpop.f32.mrf.mxu0
    %v2125 = vadd.f32 0.0, %v2124
    %v2126 = vpop.f32.mrf.mxu0
    %2127 = vmatprep.mubr.bf16.mxu0 %v922
    %2128 = vmatmul.mubr.bf16.gmra.mxu0 %v921
    %v2129 = vpop.f32.mrf.mxu0
    %v2130 = vadd.f32 0.0, %v2129
    %v2131 = vpop.f32.mrf.mxu0
    %v2132 = vpop.f32.mrf.mxu0
    %v2133 = vadd.f32 0.0, %v2132
    %v2134 = vpop.f32.mrf.mxu0
    %2135 = vmatprep.mubr.bf16.mxu0 %v926
    %2136 = vmatmul.mubr.bf16.gmra.mxu0 %v925
    %v2137 = vpop.f32.mrf.mxu0
    %v2138 = vadd.f32 0.0, %v2137
    %v2139 = vpop.f32.mrf.mxu0
    %v2140 = vpop.f32.mrf.mxu0
    %v2141 = vadd.f32 0.0, %v2140
    %v2142 = vpop.f32.mrf.mxu0
    %2143 = vmatprep.mubr.bf16.mxu0 %v930
    %2144 = vmatmul.mubr.bf16.gmra.mxu0 %v929
    %v2145 = vpop.f32.mrf.mxu0
    %v2146 = vadd.f32 0.0, %v2145
    %v2147 = vpop.f32.mrf.mxu0
    %v2148 = vpop.f32.mrf.mxu0
    %v2149 = vadd.f32 0.0, %v2148
    %v2150 = vpop.f32.mrf.mxu0
    %2151 = vmatprep.mubr.bf16.mxu0 %v934
    %2152 = vmatmul.mubr.bf16.gmra.mxu0 %v933
    %v2153 = vpop.f32.mrf.mxu0
    %v2154 = vadd.f32 0.0, %v2153
    %v2155 = vpop.f32.mrf.mxu0
    %v2156 = vpop.f32.mrf.mxu0
    %v2157 = vadd.f32 0.0, %v2156
    %v2158 = vpop.f32.mrf.mxu0
    %2159 = vmatprep.mubr.bf16.mxu0 %v938
    %2160 = vmatmul.mubr.bf16.gmra.mxu0 %v937
    %v2161 = vpop.f32.mrf.mxu0
    %v2162 = vadd.f32 0.0, %v2161
    %v2163 = vpop.f32.mrf.mxu0
    %v2164 = vpop.f32.mrf.mxu0
    %v2165 = vadd.f32 0.0, %v2164
    %v2166 = vpop.f32.mrf.mxu0
    %2167 = vmatprep.mubr.bf16.mxu0 %v942
    %2168 = vmatmul.mubr.bf16.gmra.mxu0 %v941
    %v2169 = vpop.f32.mrf.mxu0
    %v2170 = vadd.f32 0.0, %v2169
    %v2171 = vpop.f32.mrf.mxu0
    %v2172 = vpop.f32.mrf.mxu0
    %v2173 = vadd.f32 0.0, %v2172
    %v2174 = vpop.f32.mrf.mxu0
    %2175 = vmatprep.mubr.bf16.mxu0 %v946
    %2176 = vmatmul.mubr.bf16.gmra.mxu0 %v945
    %v2177 = vpop.f32.mrf.mxu0
    %v2178 = vadd.f32 0.0, %v2177
    %v2179 = vpop.f32.mrf.mxu0
    %v2180 = vpop.f32.mrf.mxu0
    %v2181 = vadd.f32 0.0, %v2180
    %v2182 = vpop.f32.mrf.mxu0
    %2183 = vmatprep.mubr.bf16.mxu0 %v950
    %2184 = vmatmul.mubr.bf16.gmra.mxu0 %v949
    %v2185 = vpop.f32.mrf.mxu0
    %v2186 = vadd.f32 0.0, %v2185
    %v2187 = vpop.f32.mrf.mxu0
    %v2188 = vpop.f32.mrf.mxu0
    %v2189 = vadd.f32 0.0, %v2188
    %v2190 = vpop.f32.mrf.mxu0
    %2191 = vmatprep.mubr.bf16.mxu0 %v954
    %2192 = vmatmul.mubr.bf16.gmra.mxu0 %v953
    %v2193 = vpop.f32.mrf.mxu0
    %v2194 = vadd.f32 0.0, %v2193
    %v2195 = vpop.f32.mrf.mxu0
    %v2196 = vpop.f32.mrf.mxu0
    %v2197 = vadd.f32 0.0, %v2196
    %v2198 = vpop.f32.mrf.mxu0
    %2199 = vmatprep.mubr.bf16.mxu0 %v958
    %2200 = vmatmul.mubr.bf16.gmra.mxu0 %v957
    %v2201 = vpop.f32.mrf.mxu0
    %v2202 = vadd.f32 0.0, %v2201
    %v2203 = vpop.f32.mrf.mxu0
    %v2204 = vpop.f32.mrf.mxu0
    %v2205 = vadd.f32 0.0, %v2204
    %v2206 = vpop.f32.mrf.mxu0
    %2207 = vmatprep.mubr.bf16.mxu0 %v962
    %2208 = vmatmul.mubr.bf16.gmra.mxu0 %v961
    %v2209 = vpop.f32.mrf.mxu0
    %v2210 = vadd.f32 0.0, %v2209
    %v2211 = vpop.f32.mrf.mxu0
    %v2212 = vpop.f32.mrf.mxu0
    %v2213 = vadd.f32 0.0, %v2212
    %v2214 = vpop.f32.mrf.mxu0
    %2215 = vmatprep.mubr.bf16.mxu0 %v966
    %2216 = vmatmul.mubr.bf16.gmra.mxu0 %v965
    %v2217 = vpop.f32.mrf.mxu0
    %v2218 = vadd.f32 0.0, %v2217
    %v2219 = vpop.f32.mrf.mxu0
    %v2220 = vpop.f32.mrf.mxu0
    %v2221 = vadd.f32 0.0, %v2220
    %v2222 = vpop.f32.mrf.mxu0
    %2223 = vmatprep.mubr.bf16.mxu0 %v970
    %2224 = vmatmul.mubr.bf16.gmra.mxu0 %v969
    %v2225 = vpop.f32.mrf.mxu0
    %v2226 = vadd.f32 0.0, %v2225
    %v2227 = vpop.f32.mrf.mxu0
    %v2228 = vpop.f32.mrf.mxu0
    %v2229 = vadd.f32 0.0, %v2228
    %v2230 = vpop.f32.mrf.mxu0
    %2231 = vmatprep.mubr.bf16.mxu0 %v974
    %2232 = vmatmul.mubr.bf16.gmra.mxu0 %v973
    %v2233 = vpop.f32.mrf.mxu0
    %v2234 = vadd.f32 0.0, %v2233
    %v2235 = vpop.f32.mrf.mxu0
    %v2236 = vpop.f32.mrf.mxu0
    %v2237 = vadd.f32 0.0, %v2236
    %v2238 = vpop.f32.mrf.mxu0
    %2239 = vmatprep.mubr.bf16.mxu0 %v978
    %2240 = vmatmul.mubr.bf16.gmra.mxu0 %v977
    %v2241 = vpop.f32.mrf.mxu0
    %v2242 = vadd.f32 0.0, %v2241
    %v2243 = vpop.f32.mrf.mxu0
    %v2244 = vpop.f32.mrf.mxu0
    %v2245 = vadd.f32 0.0, %v2244
    %v2246 = vpop.f32.mrf.mxu0
    %2247 = vmatprep.mubr.bf16.mxu0 %v982
    %2248 = vmatmul.mubr.bf16.gmra.mxu0 %v981
    %v2249 = vpop.f32.mrf.mxu0
    %v2250 = vadd.f32 0.0, %v2249
    %v2251 = vpop.f32.mrf.mxu0
    %v2252 = vpop.f32.mrf.mxu0
    %v2253 = vadd.f32 0.0, %v2252
    %v2254 = vpop.f32.mrf.mxu0
    %2255 = vdwg.mxu0
    %2256 = vmatprep.subr.bf16.mxu0 0
    %2257 = vmatpush1.bf16.msra.mxu0 %v1504
    %2258 = vmatprep.subr.bf16.mxu0 0
    %2259 = vmatpush1.bf16.msra.mxu0 %v1501
    %2260 = vmatprep.subr.bf16.mxu0 0
    %2261 = vmatpush1.bf16.msra.mxu0 %v1498
    %2262 = vmatprep.subr.bf16.mxu0 0
    %2263 = vmatpush1.bf16.msra.mxu0 %v1495
    %2264 = vmatprep.subr.bf16.mxu0 0
    %2265 = vmatpush1.bf16.msra.mxu0 %v1492
    %2266 = vmatprep.subr.bf16.mxu0 0
    %2267 = vmatpush1.bf16.msra.mxu0 %v1489
    %2268 = vmatprep.subr.bf16.mxu0 0
    %2269 = vmatpush1.bf16.msra.mxu0 %v1486
    %2270 = vmatprep.subr.bf16.mxu0 0
    %2271 = vmatpush1.bf16.msra.mxu0 %v1483
    %2272 = vmatprep.subr.bf16.mxu0 0
    %2273 = vmatpush2.bf16.msra.mxu0 %v1528
    %2274 = vmatprep.subr.bf16.mxu0 0
    %2275 = vmatpush2.bf16.msra.mxu0 %v1525
    %2276 = vmatprep.subr.bf16.mxu0 0
    %2277 = vmatpush2.bf16.msra.mxu0 %v1522
    %2278 = vmatprep.subr.bf16.mxu0 0
    %2279 = vmatpush2.bf16.msra.mxu0 %v1519
    %2280 = vmatprep.subr.bf16.mxu0 0
    %2281 = vmatpush2.bf16.msra.mxu0 %v1516
    %2282 = vmatprep.subr.bf16.mxu0 0
    %2283 = vmatpush2.bf16.msra.mxu0 %v1513
    %2284 = vmatprep.subr.bf16.mxu0 0
    %2285 = vmatpush2.bf16.msra.mxu0 %v1510
    %2286 = vmatprep.subr.bf16.mxu0 0
    %2287 = vmatpush2.bf16.msra.mxu0 %v1507
    %2288 = vmatprep.mubr.bf16.mxu0 %v912
    %2289 = vmatmul.mubr.bf16.gmra.mxu0 %v911
    %v2290 = vpop.f32.mrf.mxu0
    %v2291 = vadd.f32 %v2106, %v2290
    %v2292 = vpop.f32.mrf.mxu0
    %v2293 = vpop.f32.mrf.mxu0
    %v2294 = vadd.f32 %v2109, %v2293
    %v2295 = vpop.f32.mrf.mxu0
    %2296 = vmatprep.mubr.bf16.mxu0 %v916
    %2297 = vmatmul.mubr.bf16.gmra.mxu0 %v915
    %v2298 = vpop.f32.mrf.mxu0
    %v2299 = vadd.f32 %v2114, %v2298
    %v2300 = vpop.f32.mrf.mxu0
    %v2301 = vpop.f32.mrf.mxu0
    %v2302 = vadd.f32 %v2117, %v2301
    %v2303 = vpop.f32.mrf.mxu0
    %2304 = vmatprep.mubr.bf16.mxu0 %v920
    %2305 = vmatmul.mubr.bf16.gmra.mxu0 %v919
    %v2306 = vpop.f32.mrf.mxu0
    %v2307 = vadd.f32 %v2122, %v2306
    %v2308 = vpop.f32.mrf.mxu0
    %v2309 = vpop.f32.mrf.mxu0
    %v2310 = vadd.f32 %v2125, %v2309
    %v2311 = vpop.f32.mrf.mxu0
    %2312 = vmatprep.mubr.bf16.mxu0 %v924
    %2313 = vmatmul.mubr.bf16.gmra.mxu0 %v923
    %v2314 = vpop.f32.mrf.mxu0
    %v2315 = vadd.f32 %v2130, %v2314
    %v2316 = vpop.f32.mrf.mxu0
    %v2317 = vpop.f32.mrf.mxu0
    %v2318 = vadd.f32 %v2133, %v2317
    %v2319 = vpop.f32.mrf.mxu0
    %2320 = vmatprep.mubr.bf16.mxu0 %v928
    %2321 = vmatmul.mubr.bf16.gmra.mxu0 %v927
    %v2322 = vpop.f32.mrf.mxu0
    %v2323 = vadd.f32 %v2138, %v2322
    %v2324 = vpop.f32.mrf.mxu0
    %v2325 = vpop.f32.mrf.mxu0
    %v2326 = vadd.f32 %v2141, %v2325
    %v2327 = vpop.f32.mrf.mxu0
    %2328 = vmatprep.mubr.bf16.mxu0 %v932
    %2329 = vmatmul.mubr.bf16.gmra.mxu0 %v931
    %v2330 = vpop.f32.mrf.mxu0
    %v2331 = vadd.f32 %v2146, %v2330
    %v2332 = vpop.f32.mrf.mxu0
    %v2333 = vpop.f32.mrf.mxu0
    %v2334 = vadd.f32 %v2149, %v2333
    %v2335 = vpop.f32.mrf.mxu0
    %2336 = vmatprep.mubr.bf16.mxu0 %v936
    %2337 = vmatmul.mubr.bf16.gmra.mxu0 %v935
    %v2338 = vpop.f32.mrf.mxu0
    %v2339 = vadd.f32 %v2154, %v2338
    %v2340 = vpop.f32.mrf.mxu0
    %v2341 = vpop.f32.mrf.mxu0
    %v2342 = vadd.f32 %v2157, %v2341
    %v2343 = vpop.f32.mrf.mxu0
    %2344 = vmatprep.mubr.bf16.mxu0 %v940
    %2345 = vmatmul.mubr.bf16.gmra.mxu0 %v939
    %v2346 = vpop.f32.mrf.mxu0
    %v2347 = vadd.f32 %v2162, %v2346
    %v2348 = vpop.f32.mrf.mxu0
    %v2349 = vpop.f32.mrf.mxu0
    %v2350 = vadd.f32 %v2165, %v2349
    %v2351 = vpop.f32.mrf.mxu0
    %2352 = vmatprep.mubr.bf16.mxu0 %v944
    %2353 = vmatmul.mubr.bf16.gmra.mxu0 %v943
    %v2354 = vpop.f32.mrf.mxu0
    %v2355 = vadd.f32 %v2170, %v2354
    %v2356 = vpop.f32.mrf.mxu0
    %v2357 = vpop.f32.mrf.mxu0
    %v2358 = vadd.f32 %v2173, %v2357
    %v2359 = vpop.f32.mrf.mxu0
    %2360 = vmatprep.mubr.bf16.mxu0 %v948
    %2361 = vmatmul.mubr.bf16.gmra.mxu0 %v947
    %v2362 = vpop.f32.mrf.mxu0
    %v2363 = vadd.f32 %v2178, %v2362
    %v2364 = vpop.f32.mrf.mxu0
    %v2365 = vpop.f32.mrf.mxu0
    %v2366 = vadd.f32 %v2181, %v2365
    %v2367 = vpop.f32.mrf.mxu0
    %2368 = vmatprep.mubr.bf16.mxu0 %v952
    %2369 = vmatmul.mubr.bf16.gmra.mxu0 %v951
    %v2370 = vpop.f32.mrf.mxu0
    %v2371 = vadd.f32 %v2186, %v2370
    %v2372 = vpop.f32.mrf.mxu0
    %v2373 = vpop.f32.mrf.mxu0
    %v2374 = vadd.f32 %v2189, %v2373
    %v2375 = vpop.f32.mrf.mxu0
    %2376 = vmatprep.mubr.bf16.mxu0 %v956
    %2377 = vmatmul.mubr.bf16.gmra.mxu0 %v955
    %v2378 = vpop.f32.mrf.mxu0
    %v2379 = vadd.f32 %v2194, %v2378
    %v2380 = vpop.f32.mrf.mxu0
    %v2381 = vpop.f32.mrf.mxu0
    %v2382 = vadd.f32 %v2197, %v2381
    %v2383 = vpop.f32.mrf.mxu0
    %2384 = vmatprep.mubr.bf16.mxu0 %v960
    %2385 = vmatmul.mubr.bf16.gmra.mxu0 %v959
    %v2386 = vpop.f32.mrf.mxu0
    %v2387 = vadd.f32 %v2202, %v2386
    %v2388 = vpop.f32.mrf.mxu0
    %v2389 = vpop.f32.mrf.mxu0
    %v2390 = vadd.f32 %v2205, %v2389
    %v2391 = vpop.f32.mrf.mxu0
    %2392 = vmatprep.mubr.bf16.mxu0 %v964
    %2393 = vmatmul.mubr.bf16.gmra.mxu0 %v963
    %v2394 = vpop.f32.mrf.mxu0
    %v2395 = vadd.f32 %v2210, %v2394
    %v2396 = vpop.f32.mrf.mxu0
    %v2397 = vpop.f32.mrf.mxu0
    %v2398 = vadd.f32 %v2213, %v2397
    %v2399 = vpop.f32.mrf.mxu0
    %2400 = vmatprep.mubr.bf16.mxu0 %v968
    %2401 = vmatmul.mubr.bf16.gmra.mxu0 %v967
    %v2402 = vpop.f32.mrf.mxu0
    %v2403 = vadd.f32 %v2218, %v2402
    %v2404 = vpop.f32.mrf.mxu0
    %v2405 = vpop.f32.mrf.mxu0
    %v2406 = vadd.f32 %v2221, %v2405
    %v2407 = vpop.f32.mrf.mxu0
    %2408 = vmatprep.mubr.bf16.mxu0 %v972
    %2409 = vmatmul.mubr.bf16.gmra.mxu0 %v971
    %v2410 = vpop.f32.mrf.mxu0
    %v2411 = vadd.f32 %v2226, %v2410
    %v2412 = vpop.f32.mrf.mxu0
    %v2413 = vpop.f32.mrf.mxu0
    %v2414 = vadd.f32 %v2229, %v2413
    %v2415 = vpop.f32.mrf.mxu0
    %2416 = vmatprep.mubr.bf16.mxu0 %v976
    %2417 = vmatmul.mubr.bf16.gmra.mxu0 %v975
    %v2418 = vpop.f32.mrf.mxu0
    %v2419 = vadd.f32 %v2234, %v2418
    %v2420 = vpop.f32.mrf.mxu0
    %v2421 = vpop.f32.mrf.mxu0
    %v2422 = vadd.f32 %v2237, %v2421
    %v2423 = vpop.f32.mrf.mxu0
    %2424 = vmatprep.mubr.bf16.mxu0 %v980
    %2425 = vmatmul.mubr.bf16.gmra.mxu0 %v979
    %v2426 = vpop.f32.mrf.mxu0
    %v2427 = vadd.f32 %v2242, %v2426
    %v2428 = vpop.f32.mrf.mxu0
    %v2429 = vpop.f32.mrf.mxu0
    %v2430 = vadd.f32 %v2245, %v2429
    %v2431 = vpop.f32.mrf.mxu0
    %2432 = vmatprep.mubr.bf16.mxu0 %v984
    %2433 = vmatmul.mubr.bf16.gmra.mxu0 %v983
    %v2434 = vpop.f32.mrf.mxu0
    %v2435 = vadd.f32 %v2250, %v2434
    %v2436 = vpop.f32.mrf.mxu0
    %v2437 = vpop.f32.mrf.mxu0
    %v2438 = vadd.f32 %v2253, %v2437
    %v2439 = vpop.f32.mrf.mxu0
    %2440 = vdwg.mxu0
    %v2441 = vmax.f32 %v1883, 0.0
    %v2442 = vmax.f32 %v1885, 0.0
    %v2443 = vmax.f32 %v2291, 0.0
    %v2444 = vmax.f32 %v1887, 0.0
    %v2445 = vmax.f32 %v1889, 0.0
    %v2446 = vmax.f32 %v2294, 0.0
    %v2447 = vmax.f32 %v1893, 0.0
    %v2448 = vmax.f32 %v1895, 0.0
    %v2449 = vmax.f32 %v2299, 0.0
    %v2450 = vmax.f32 %v1897, 0.0
    %v2451 = vmax.f32 %v1899, 0.0
    %v2452 = vmax.f32 %v2302, 0.0
    %v2453 = vmax.f32 %v1903, 0.0
    %v2454 = vmax.f32 %v1905, 0.0
    %v2455 = vmax.f32 %v2307, 0.0
    %v2456 = vmax.f32 %v1907, 0.0
    %v2457 = vmax.f32 %v1909, 0.0
    %v2458 = vmax.f32 %v2310, 0.0
    %v2459 = vmax.f32 %v1913, 0.0
    %v2460 = vmax.f32 %v1915, 0.0
    %v2461 = vmax.f32 %v2315, 0.0
    %v2462 = vmax.f32 %v1917, 0.0
    %v2463 = vmax.f32 %v1919, 0.0
    %v2464 = vmax.f32 %v2318, 0.0
    %v2465 = vmax.f32 %v1923, 0.0
    %v2466 = vmax.f32 %v1925, 0.0
    %v2467 = vmax.f32 %v2323, 0.0
    %v2468 = vmax.f32 %v1927, 0.0
    %v2469 = vmax.f32 %v1929, 0.0
    %v2470 = vmax.f32 %v2326, 0.0
    %v2471 = vmax.f32 %v1933, 0.0
    %v2472 = vmax.f32 %v1935, 0.0
    %v2473 = vmax.f32 %v2331, 0.0
    %v2474 = vmax.f32 %v1937, 0.0
    %v2475 = vmax.f32 %v1939, 0.0
    %v2476 = vmax.f32 %v2334, 0.0
    %v2477 = vmax.f32 %v1943, 0.0
    %v2478 = vmax.f32 %v1945, 0.0
    %v2479 = vmax.f32 %v2339, 0.0
    %v2480 = vmax.f32 %v1947, 0.0
    %v2481 = vmax.f32 %v1949, 0.0
    %v2482 = vmax.f32 %v2342, 0.0
    %v2483 = vmax.f32 %v1953, 0.0
    %v2484 = vmax.f32 %v1955, 0.0
    %v2485 = vmax.f32 %v2347, 0.0
    %v2486 = vmax.f32 %v1957, 0.0
    %v2487 = vmax.f32 %v1959, 0.0
    %v2488 = vmax.f32 %v2350, 0.0
    %v2489 = vmax.f32 %v1963, 0.0
    %v2490 = vmax.f32 %v1965, 0.0
    %v2491 = vmax.f32 %v2355, 0.0
    %v2492 = vmax.f32 %v1967, 0.0
    %v2493 = vmax.f32 %v1969, 0.0
    %v2494 = vmax.f32 %v2358, 0.0
    %v2495 = vmax.f32 %v1973, 0.0
    %v2496 = vmax.f32 %v1975, 0.0
    %v2497 = vmax.f32 %v2363, 0.0
    %v2498 = vmax.f32 %v1977, 0.0
    %v2499 = vmax.f32 %v1979, 0.0
    %v2500 = vmax.f32 %v2366, 0.0
    %v2501 = vmax.f32 %v1983, 0.0
    %v2502 = vmax.f32 %v1985, 0.0
    %v2503 = vmax.f32 %v2371, 0.0
    %v2504 = vmax.f32 %v1987, 0.0
    %v2505 = vmax.f32 %v1989, 0.0
    %v2506 = vmax.f32 %v2374, 0.0
    %v2507 = vmax.f32 %v1993, 0.0
    %v2508 = vmax.f32 %v1995, 0.0
    %v2509 = vmax.f32 %v2379, 0.0
    %v2510 = vmax.f32 %v1997, 0.0
    %v2511 = vmax.f32 %v1999, 0.0
    %v2512 = vmax.f32 %v2382, 0.0
    %v2513 = vmax.f32 %v2003, 0.0
    %v2514 = vmax.f32 %v2005, 0.0
    %v2515 = vmax.f32 %v2387, 0.0
    %v2516 = vmax.f32 %v2007, 0.0
    %v2517 = vmax.f32 %v2009, 0.0
    %v2518 = vmax.f32 %v2390, 0.0
    %v2519 = vmax.f32 %v2013, 0.0
    %v2520 = vmax.f32 %v2015, 0.0
    %v2521 = vmax.f32 %v2395, 0.0
    %v2522 = vmax.f32 %v2017, 0.0
    %v2523 = vmax.f32 %v2019, 0.0
    %v2524 = vmax.f32 %v2398, 0.0
    %v2525 = vmax.f32 %v2023, 0.0
    %v2526 = vmax.f32 %v2025, 0.0
    %v2527 = vmax.f32 %v2403, 0.0
    %v2528 = vmax.f32 %v2027, 0.0
    %v2529 = vmax.f32 %v2029, 0.0
    %v2530 = vmax.f32 %v2406, 0.0
    %v2531 = vmax.f32 %v2033, 0.0
    %v2532 = vmax.f32 %v2035, 0.0
    %v2533 = vmax.f32 %v2411, 0.0
    %v2534 = vmax.f32 %v2037, 0.0
    %v2535 = vmax.f32 %v2039, 0.0
    %v2536 = vmax.f32 %v2414, 0.0
    %v2537 = vmax.f32 %v2043, 0.0
    %v2538 = vmax.f32 %v2045, 0.0
    %v2539 = vmax.f32 %v2419, 0.0
    %v2540 = vmax.f32 %v2047, 0.0
    %v2541 = vmax.f32 %v2049, 0.0
    %v2542 = vmax.f32 %v2422, 0.0
    %v2543 = vmax.f32 %v2053, 0.0
    %v2544 = vmax.f32 %v2055, 0.0
    %v2545 = vmax.f32 %v2427, 0.0
    %v2546 = vmax.f32 %v2057, 0.0
    %v2547 = vmax.f32 %v2059, 0.0
    %v2548 = vmax.f32 %v2430, 0.0
    %v2549 = vmax.f32 %v2063, 0.0
    %v2550 = vmax.f32 %v2065, 0.0
    %v2551 = vmax.f32 %v2435, 0.0
    %v2552 = vmax.f32 %v2067, 0.0
    %v2553 = vmax.f32 %v2069, 0.0
    %v2554 = vmax.f32 %v2438, 0.0
    %v2555 = vpack.c.bf16 %v2444, %v2441
    %v2556 = vpack.c.bf16 %v2445, %v2442
    %v2557 = vpack.c.bf16 %v2446, %v2443
    %v2558 = vpack.c.bf16 %v2450, %v2447
    %v2559 = vpack.c.bf16 %v2451, %v2448
    %v2560 = vpack.c.bf16 %v2452, %v2449
    %v2561 = vpack.c.bf16 %v2456, %v2453
    %v2562 = vpack.c.bf16 %v2457, %v2454
    %v2563 = vpack.c.bf16 %v2458, %v2455
    %v2564 = vpack.c.bf16 %v2462, %v2459
    %v2565 = vpack.c.bf16 %v2463, %v2460
    %v2566 = vpack.c.bf16 %v2464, %v2461
    %v2567 = vpack.c.bf16 %v2468, %v2465
    %v2568 = vpack.c.bf16 %v2469, %v2466
    %v2569 = vpack.c.bf16 %v2470, %v2467
    %v2570 = vpack.c.bf16 %v2474, %v2471
    %v2571 = vpack.c.bf16 %v2475, %v2472
    %v2572 = vpack.c.bf16 %v2476, %v2473
    %v2573 = vpack.c.bf16 %v2480, %v2477
    %v2574 = vpack.c.bf16 %v2481, %v2478
    %v2575 = vpack.c.bf16 %v2482, %v2479
    %v2576 = vpack.c.bf16 %v2486, %v2483
    %v2577 = vpack.c.bf16 %v2487, %v2484
    %v2578 = vpack.c.bf16 %v2488, %v2485
    %v2579 = vpack.c.bf16 %v2492, %v2489
    %v2580 = vpack.c.bf16 %v2493, %v2490
    %v2581 = vpack.c.bf16 %v2494, %v2491
    %v2582 = vpack.c.bf16 %v2498, %v2495
    %v2583 = vpack.c.bf16 %v2499, %v2496
    %v2584 = vpack.c.bf16 %v2500, %v2497
    %v2585 = vpack.c.bf16 %v2504, %v2501
    %v2586 = vpack.c.bf16 %v2505, %v2502
    %v2587 = vpack.c.bf16 %v2506, %v2503
    %v2588 = vpack.c.bf16 %v2510, %v2507
    %v2589 = vpack.c.bf16 %v2511, %v2508
    %v2590 = vpack.c.bf16 %v2512, %v2509
    %v2591 = vpack.c.bf16 %v2516, %v2513
    %v2592 = vpack.c.bf16 %v2517, %v2514
    %v2593 = vpack.c.bf16 %v2518, %v2515
    %v2594 = vpack.c.bf16 %v2522, %v2519
    %v2595 = vpack.c.bf16 %v2523, %v2520
    %v2596 = vpack.c.bf16 %v2524, %v2521
    %v2597 = vpack.c.bf16 %v2528, %v2525
    %v2598 = vpack.c.bf16 %v2529, %v2526
    %v2599 = vpack.c.bf16 %v2530, %v2527
    %v2600 = vpack.c.bf16 %v2534, %v2531
    %v2601 = vpack.c.bf16 %v2535, %v2532
    %v2602 = vpack.c.bf16 %v2536, %v2533
    %v2603 = vpack.c.bf16 %v2540, %v2537
    %v2604 = vpack.c.bf16 %v2541, %v2538
    %v2605 = vpack.c.bf16 %v2542, %v2539
    %v2606 = vpack.c.bf16 %v2546, %v2543
    %v2607 = vpack.c.bf16 %v2547, %v2544
    %v2608 = vpack.c.bf16 %v2548, %v2545
    %v2609 = vpack.c.bf16 %v2552, %v2549
    %v2610 = vpack.c.bf16 %v2553, %v2550
    %v2611 = vpack.c.bf16 %v2554, %v2551
    %v2612 = vld [vmem:[%s4] sm:$0xf]
    %v2613 = vld [vmem:[%s4 + $0x4] sm:$0xf]
    %v2614 = vld [vmem:[%s4 + $0x8] sm:$0xf]
    %v2615 = vld [vmem:[%s4 + $0xc] sm:$0xf]
    %v2616 = vld [vmem:[%s4 + $0x10] sm:$0xf]
    %v2617 = vld [vmem:[%s4 + $0x14] sm:$0xf]
    %v2618 = vld [vmem:[%s4 + $0x18] sm:$0xf]
    %v2619 = vld [vmem:[%s4 + $0x1c] sm:$0xf]
    %v2620 = vld [vmem:[%s4 + $0x20] sm:$0xf]
    %v2621 = vld [vmem:[%s4 + $0x24] sm:$0xf]
    %v2622 = vld [vmem:[%s4 + $0x28] sm:$0xf]
    %v2623 = vld [vmem:[%s4 + $0x2c] sm:$0xf]
    %v2624 = vld [vmem:[%s4 + $0x30] sm:$0xf]
    %v2625 = vld [vmem:[%s4 + $0x34] sm:$0xf]
    %v2626 = vld [vmem:[%s4 + $0x38] sm:$0xf]
    %v2627 = vld [vmem:[%s4 + $0x3c] sm:$0xf]
    %v2628 = vld [vmem:[%s4 + $0x40] sm:$0xf]
    %v2629 = vld [vmem:[%s4 + $0x44] sm:$0xf]
    %v2630 = vld [vmem:[%s4 + $0x48] sm:$0xf]
    %v2631 = vld [vmem:[%s4 + $0x4c] sm:$0xf]
    %v2632 = vld [vmem:[%s4 + $0x50] sm:$0xf]
    %v2633 = vld [vmem:[%s4 + $0x54] sm:$0xf]
    %v2634 = vld [vmem:[%s4 + $0x58] sm:$0xf]
    %v2635 = vld [vmem:[%s4 + $0x5c] sm:$0xf]
    %v2636 = vld [vmem:[%s4 + $0x60] sm:$0xf]
    %v2637 = vld [vmem:[%s4 + $0x64] sm:$0xf]
    %v2638 = vld [vmem:[%s4 + $0x68] sm:$0xf]
    %v2639 = vld [vmem:[%s4 + $0x6c] sm:$0xf]
    %v2640 = vld [vmem:[%s4 + $0x70] sm:$0xf]
    %v2641 = vld [vmem:[%s4 + $0x74] sm:$0xf]
    %v2642 = vld [vmem:[%s4 + $0x78] sm:$0xf]
    %v2643 = vld [vmem:[%s4 + $0x7c] sm:$0xf]
    %v2644 = vld [vmem:[%s4 + $0x80] sm:$0xf]
    %v2645 = vld [vmem:[%s4 + $0x84] sm:$0xf]
    %v2646 = vld [vmem:[%s4 + $0x88] sm:$0xf]
    %v2647 = vld [vmem:[%s4 + $0x8c] sm:$0xf]
    %v2648 = vld [vmem:[%s4 + $0x90] sm:$0xf]
    %v2649 = vld [vmem:[%s4 + $0x94] sm:$0xf]
    %v2650 = vld [vmem:[%s4 + $0x98] sm:$0xf]
    %v2651 = vld [vmem:[%s4 + $0x9c] sm:$0xf]
    %v2652 = vld [vmem:[%s4 + $0xa0] sm:$0xf]
    %v2653 = vld [vmem:[%s4 + $0xa4] sm:$0xf]
    %v2654 = vld [vmem:[%s4 + $0xa8] sm:$0xf]
    %v2655 = vld [vmem:[%s4 + $0xac] sm:$0xf]
    %v2656 = vld [vmem:[%s4 + $0xb0] sm:$0xf]
    %v2657 = vld [vmem:[%s4 + $0xb4] sm:$0xf]
    %v2658 = vld [vmem:[%s4 + $0xb8] sm:$0xf]
    %v2659 = vld [vmem:[%s4 + $0xbc] sm:$0xf]
    %v2708 = vunpack.c.l.b16 %v2612
    %v2709 = vunpack.c.l.b16 %v2613
    %v2710 = vunpack.c.l.b16 %v2614
    %v2711 = vunpack.c.l.b16 %v2615
    %v2712 = vunpack.c.l.b16 %v2616
    %v2713 = vunpack.c.l.b16 %v2617
    %v2714 = vunpack.c.l.b16 %v2618
    %v2715 = vunpack.c.l.b16 %v2619
    %v2716 = vunpack.c.l.b16 %v2620
    %v2717 = vunpack.c.l.b16 %v2621
    %v2718 = vunpack.c.l.b16 %v2622
    %v2719 = vunpack.c.l.b16 %v2623
    %v2720 = vunpack.c.l.b16 %v2624
    %v2721 = vunpack.c.l.b16 %v2625
    %v2722 = vunpack.c.l.b16 %v2626
    %v2723 = vunpack.c.l.b16 %v2627
    %v2724 = vunpack.c.l.b16 %v2628
    %v2725 = vunpack.c.l.b16 %v2629
    %v2726 = vunpack.c.l.b16 %v2630
    %v2727 = vunpack.c.l.b16 %v2631
    %v2728 = vunpack.c.l.b16 %v2632
    %v2729 = vunpack.c.l.b16 %v2633
    %v2730 = vunpack.c.l.b16 %v2634
    %v2731 = vunpack.c.l.b16 %v2635
    %v2732 = vunpack.c.l.b16 %v2636
    %v2733 = vunpack.c.l.b16 %v2637
    %v2734 = vunpack.c.l.b16 %v2638
    %v2735 = vunpack.c.l.b16 %v2639
    %v2736 = vunpack.c.l.b16 %v2640
    %v2737 = vunpack.c.l.b16 %v2641
    %v2738 = vunpack.c.l.b16 %v2642
    %v2739 = vunpack.c.l.b16 %v2643
    %v2740 = vunpack.c.l.b16 %v2644
    %v2741 = vunpack.c.l.b16 %v2645
    %v2742 = vunpack.c.l.b16 %v2646
    %v2743 = vunpack.c.l.b16 %v2647
    %v2744 = vunpack.c.l.b16 %v2648
    %v2745 = vunpack.c.l.b16 %v2649
    %v2746 = vunpack.c.l.b16 %v2650
    %v2747 = vunpack.c.l.b16 %v2651
    %v2748 = vunpack.c.l.b16 %v2652
    %v2749 = vunpack.c.l.b16 %v2653
    %v2750 = vunpack.c.l.b16 %v2654
    %v2751 = vunpack.c.l.b16 %v2655
    %v2752 = vunpack.c.l.b16 %v2656
    %v2753 = vunpack.c.l.b16 %v2657
    %v2754 = vunpack.c.l.b16 %v2658
    %v2755 = vunpack.c.l.b16 %v2659
    %v2756 = vpack.c.b16 %v2709, %v2708
    %v2757 = vpack.c.b16 %v2711, %v2710
    %v2758 = vpack.c.b16 %v2713, %v2712
    %v2759 = vpack.c.b16 %v2715, %v2714
    %v2760 = vpack.c.b16 %v2717, %v2716
    %v2761 = vpack.c.b16 %v2719, %v2718
    %v2762 = vpack.c.b16 %v2721, %v2720
    %v2763 = vpack.c.b16 %v2723, %v2722
    %v2764 = vpack.c.b16 %v2725, %v2724
    %v2765 = vpack.c.b16 %v2727, %v2726
    %v2766 = vpack.c.b16 %v2729, %v2728
    %v2767 = vpack.c.b16 %v2731, %v2730
    %v2768 = vpack.c.b16 %v2733, %v2732
    %v2769 = vpack.c.b16 %v2735, %v2734
    %v2770 = vpack.c.b16 %v2737, %v2736
    %v2771 = vpack.c.b16 %v2739, %v2738
    %v2772 = vpack.c.b16 %v2741, %v2740
    %v2773 = vpack.c.b16 %v2743, %v2742
    %v2774 = vpack.c.b16 %v2745, %v2744
    %v2775 = vpack.c.b16 %v2747, %v2746
    %v2776 = vpack.c.b16 %v2749, %v2748
    %v2777 = vpack.c.b16 %v2751, %v2750
    %v2778 = vpack.c.b16 %v2753, %v2752
    %v2779 = vpack.c.b16 %v2755, %v2754
    %2804 = vmatprep.subr.bf16.mxu0 0
    %2805 = vmatpush1.bf16.msra.mxu0 %v2763
    %2806 = vmatprep.subr.bf16.mxu0 0
    %2807 = vmatpush1.bf16.msra.mxu0 %v2762
    %2808 = vmatprep.subr.bf16.mxu0 0
    %2809 = vmatpush1.bf16.msra.mxu0 %v2761
    %2810 = vmatprep.subr.bf16.mxu0 0
    %2811 = vmatpush1.bf16.msra.mxu0 %v2760
    %2812 = vmatprep.subr.bf16.mxu0 0
    %2813 = vmatpush1.bf16.msra.mxu0 %v2759
    %2814 = vmatprep.subr.bf16.mxu0 0
    %2815 = vmatpush1.bf16.msra.mxu0 %v2758
    %2816 = vmatprep.subr.bf16.mxu0 0
    %2817 = vmatpush1.bf16.msra.mxu0 %v2757
    %2818 = vmatprep.subr.bf16.mxu0 0
    %2819 = vmatpush1.bf16.msra.mxu0 %v2756
    %2820 = vmatprep.subr.bf16.mxu0 0
    %2821 = vmatpush2.bf16.msra.mxu0 %v2771
    %2822 = vmatprep.subr.bf16.mxu0 0
    %2823 = vmatpush2.bf16.msra.mxu0 %v2770
    %2824 = vmatprep.subr.bf16.mxu0 0
    %2825 = vmatpush2.bf16.msra.mxu0 %v2769
    %2826 = vmatprep.subr.bf16.mxu0 0
    %2827 = vmatpush2.bf16.msra.mxu0 %v2768
    %2828 = vmatprep.subr.bf16.mxu0 0
    %2829 = vmatpush2.bf16.msra.mxu0 %v2767
    %2830 = vmatprep.subr.bf16.mxu0 0
    %2831 = vmatpush2.bf16.msra.mxu0 %v2766
    %2832 = vmatprep.subr.bf16.mxu0 0
    %2833 = vmatpush2.bf16.msra.mxu0 %v2765
    %2834 = vmatprep.subr.bf16.mxu0 0
    %2835 = vmatpush2.bf16.msra.mxu0 %v2764
    %2836 = vmatprep.mubr.bf16.mxu0 %v2556
    %2837 = vmatmul.mubr.bf16.gmra.mxu0 %v2555
    %v2838 = vpop.f32.mrf.mxu0
    %v2839 = vadd.f32 0.0, %v2838
    %v2840 = vpop.f32.mrf.mxu0
    %v2841 = vpop.f32.mrf.mxu0
    %v2842 = vadd.f32 0.0, %v2841
    %v2843 = vpop.f32.mrf.mxu0
    %2844 = vmatprep.mubr.bf16.mxu0 %v2559
    %2845 = vmatmul.mubr.bf16.gmra.mxu0 %v2558
    %v2846 = vpop.f32.mrf.mxu0
    %v2847 = vadd.f32 0.0, %v2846
    %v2848 = vpop.f32.mrf.mxu0
    %v2849 = vpop.f32.mrf.mxu0
    %v2850 = vadd.f32 0.0, %v2849
    %v2851 = vpop.f32.mrf.mxu0
    %2852 = vmatprep.mubr.bf16.mxu0 %v2562
    %2853 = vmatmul.mubr.bf16.gmra.mxu0 %v2561
    %v2854 = vpop.f32.mrf.mxu0
    %v2855 = vadd.f32 0.0, %v2854
    %v2856 = vpop.f32.mrf.mxu0
    %v2857 = vpop.f32.mrf.mxu0
    %v2858 = vadd.f32 0.0, %v2857
    %v2859 = vpop.f32.mrf.mxu0
    %2860 = vmatprep.mubr.bf16.mxu0 %v2565
    %2861 = vmatmul.mubr.bf16.gmra.mxu0 %v2564
    %v2862 = vpop.f32.mrf.mxu0
    %v2863 = vadd.f32 0.0, %v2862
    %v2864 = vpop.f32.mrf.mxu0
    %v2865 = vpop.f32.mrf.mxu0
    %v2866 = vadd.f32 0.0, %v2865
    %v2867 = vpop.f32.mrf.mxu0
    %2868 = vmatprep.mubr.bf16.mxu0 %v2568
    %2869 = vmatmul.mubr.bf16.gmra.mxu0 %v2567
    %v2870 = vpop.f32.mrf.mxu0
    %v2871 = vadd.f32 0.0, %v2870
    %v2872 = vpop.f32.mrf.mxu0
    %v2873 = vpop.f32.mrf.mxu0
    %v2874 = vadd.f32 0.0, %v2873
    %v2875 = vpop.f32.mrf.mxu0
    %2876 = vmatprep.mubr.bf16.mxu0 %v2571
    %2877 = vmatmul.mubr.bf16.gmra.mxu0 %v2570
    %v2878 = vpop.f32.mrf.mxu0
    %v2879 = vadd.f32 0.0, %v2878
    %v2880 = vpop.f32.mrf.mxu0
    %v2881 = vpop.f32.mrf.mxu0
    %v2882 = vadd.f32 0.0, %v2881
    %v2883 = vpop.f32.mrf.mxu0
    %2884 = vmatprep.mubr.bf16.mxu0 %v2574
    %2885 = vmatmul.mubr.bf16.gmra.mxu0 %v2573
    %v2886 = vpop.f32.mrf.mxu0
    %v2887 = vadd.f32 0.0, %v2886
    %v2888 = vpop.f32.mrf.mxu0
    %v2889 = vpop.f32.mrf.mxu0
    %v2890 = vadd.f32 0.0, %v2889
    %v2891 = vpop.f32.mrf.mxu0
    %2892 = vmatprep.mubr.bf16.mxu0 %v2577
    %2893 = vmatmul.mubr.bf16.gmra.mxu0 %v2576
    %v2894 = vpop.f32.mrf.mxu0
    %v2895 = vadd.f32 0.0, %v2894
    %v2896 = vpop.f32.mrf.mxu0
    %v2897 = vpop.f32.mrf.mxu0
    %v2898 = vadd.f32 0.0, %v2897
    %v2899 = vpop.f32.mrf.mxu0
    %2900 = vmatprep.mubr.bf16.mxu0 %v2580
    %2901 = vmatmul.mubr.bf16.gmra.mxu0 %v2579
    %v2902 = vpop.f32.mrf.mxu0
    %v2903 = vadd.f32 0.0, %v2902
    %v2904 = vpop.f32.mrf.mxu0
    %v2905 = vpop.f32.mrf.mxu0
    %v2906 = vadd.f32 0.0, %v2905
    %v2907 = vpop.f32.mrf.mxu0
    %2908 = vmatprep.mubr.bf16.mxu0 %v2583
    %2909 = vmatmul.mubr.bf16.gmra.mxu0 %v2582
    %v2910 = vpop.f32.mrf.mxu0
    %v2911 = vadd.f32 0.0, %v2910
    %v2912 = vpop.f32.mrf.mxu0
    %v2913 = vpop.f32.mrf.mxu0
    %v2914 = vadd.f32 0.0, %v2913
    %v2915 = vpop.f32.mrf.mxu0
    %2916 = vmatprep.mubr.bf16.mxu0 %v2586
    %2917 = vmatmul.mubr.bf16.gmra.mxu0 %v2585
    %v2918 = vpop.f32.mrf.mxu0
    %v2919 = vadd.f32 0.0, %v2918
    %v2920 = vpop.f32.mrf.mxu0
    %v2921 = vpop.f32.mrf.mxu0
    %v2922 = vadd.f32 0.0, %v2921
    %v2923 = vpop.f32.mrf.mxu0
    %2924 = vmatprep.mubr.bf16.mxu0 %v2589
    %2925 = vmatmul.mubr.bf16.gmra.mxu0 %v2588
    %v2926 = vpop.f32.mrf.mxu0
    %v2927 = vadd.f32 0.0, %v2926
    %v2928 = vpop.f32.mrf.mxu0
    %v2929 = vpop.f32.mrf.mxu0
    %v2930 = vadd.f32 0.0, %v2929
    %v2931 = vpop.f32.mrf.mxu0
    %2932 = vmatprep.mubr.bf16.mxu0 %v2592
    %2933 = vmatmul.mubr.bf16.gmra.mxu0 %v2591
    %v2934 = vpop.f32.mrf.mxu0
    %v2935 = vadd.f32 0.0, %v2934
    %v2936 = vpop.f32.mrf.mxu0
    %v2937 = vpop.f32.mrf.mxu0
    %v2938 = vadd.f32 0.0, %v2937
    %v2939 = vpop.f32.mrf.mxu0
    %2940 = vmatprep.mubr.bf16.mxu0 %v2595
    %2941 = vmatmul.mubr.bf16.gmra.mxu0 %v2594
    %v2942 = vpop.f32.mrf.mxu0
    %v2943 = vadd.f32 0.0, %v2942
    %v2944 = vpop.f32.mrf.mxu0
    %v2945 = vpop.f32.mrf.mxu0
    %v2946 = vadd.f32 0.0, %v2945
    %v2947 = vpop.f32.mrf.mxu0
    %2948 = vmatprep.mubr.bf16.mxu0 %v2598
    %2949 = vmatmul.mubr.bf16.gmra.mxu0 %v2597
    %v2950 = vpop.f32.mrf.mxu0
    %v2951 = vadd.f32 0.0, %v2950
    %v2952 = vpop.f32.mrf.mxu0
    %v2953 = vpop.f32.mrf.mxu0
    %v2954 = vadd.f32 0.0, %v2953
    %v2955 = vpop.f32.mrf.mxu0
    %2956 = vmatprep.mubr.bf16.mxu0 %v2601
    %2957 = vmatmul.mubr.bf16.gmra.mxu0 %v2600
    %v2958 = vpop.f32.mrf.mxu0
    %v2959 = vadd.f32 0.0, %v2958
    %v2960 = vpop.f32.mrf.mxu0
    %v2961 = vpop.f32.mrf.mxu0
    %v2962 = vadd.f32 0.0, %v2961
    %v2963 = vpop.f32.mrf.mxu0
    %2964 = vmatprep.mubr.bf16.mxu0 %v2604
    %2965 = vmatmul.mubr.bf16.gmra.mxu0 %v2603
    %v2966 = vpop.f32.mrf.mxu0
    %v2967 = vadd.f32 0.0, %v2966
    %v2968 = vpop.f32.mrf.mxu0
    %v2969 = vpop.f32.mrf.mxu0
    %v2970 = vadd.f32 0.0, %v2969
    %v2971 = vpop.f32.mrf.mxu0
    %2972 = vmatprep.mubr.bf16.mxu0 %v2607
    %2973 = vmatmul.mubr.bf16.gmra.mxu0 %v2606
    %v2974 = vpop.f32.mrf.mxu0
    %v2975 = vadd.f32 0.0, %v2974
    %v2976 = vpop.f32.mrf.mxu0
    %v2977 = vpop.f32.mrf.mxu0
    %v2978 = vadd.f32 0.0, %v2977
    %v2979 = vpop.f32.mrf.mxu0
    %2980 = vmatprep.mubr.bf16.mxu0 %v2610
    %2981 = vmatmul.mubr.bf16.gmra.mxu0 %v2609
    %v2982 = vpop.f32.mrf.mxu0
    %v2983 = vadd.f32 0.0, %v2982
    %v2984 = vpop.f32.mrf.mxu0
    %v2985 = vpop.f32.mrf.mxu0
    %v2986 = vadd.f32 0.0, %v2985
    %v2987 = vpop.f32.mrf.mxu0
    %2988 = vdwg.mxu0
    %2989 = vmatprep.subr.bf16.mxu0 0
    %2990 = vmatpush1.bf16.msra.mxu0 %v2779
    %2991 = vmatprep.subr.bf16.mxu0 0
    %2992 = vmatpush1.bf16.msra.mxu0 %v2778
    %2993 = vmatprep.subr.bf16.mxu0 0
    %2994 = vmatpush1.bf16.msra.mxu0 %v2777
    %2995 = vmatprep.subr.bf16.mxu0 0
    %2996 = vmatpush1.bf16.msra.mxu0 %v2776
    %2997 = vmatprep.subr.bf16.mxu0 0
    %2998 = vmatpush1.bf16.msra.mxu0 %v2775
    %2999 = vmatprep.subr.bf16.mxu0 0
    %3000 = vmatpush1.bf16.msra.mxu0 %v2774
    %3001 = vmatprep.subr.bf16.mxu0 0
    %3002 = vmatpush1.bf16.msra.mxu0 %v2773
    %3003 = vmatprep.subr.bf16.mxu0 0
    %3004 = vmatpush1.bf16.msra.mxu0 %v2772
    %3005 = vmatprep.subr.bf16.mxu0 0
    %3006 = vmatpush2.bf16.msra.mxu0 0
    %3007 = vmatprep.subr.bf16.mxu0 0
    %3008 = vmatpush2.bf16.msra.mxu0 0
    %3009 = vmatprep.subr.bf16.mxu0 0
    %3010 = vmatpush2.bf16.msra.mxu0 0
    %3011 = vmatprep.subr.bf16.mxu0 0
    %3012 = vmatpush2.bf16.msra.mxu0 0
    %3013 = vmatprep.subr.bf16.mxu0 0
    %3014 = vmatpush2.bf16.msra.mxu0 0
    %3015 = vmatprep.subr.bf16.mxu0 0
    %3016 = vmatpush2.bf16.msra.mxu0 0
    %3017 = vmatprep.subr.bf16.mxu0 0
    %3018 = vmatpush2.bf16.msra.mxu0 0
    %3019 = vmatprep.subr.bf16.mxu0 0
    %3020 = vmatpush2.bf16.msra.mxu0 0
    %3021 = vmatprep.mubr.bf16.mxu0 0
    %3022 = vmatmul.mubr.bf16.gmra.mxu0 %v2557
    %v3023 = vpop.f32.mrf.mxu0
    %v3024 = vadd.f32 %v2839, %v3023
    %v3025 = vpop.f32.mrf.mxu0
    %v3026 = vpop.f32.mrf.mxu0
    %v3027 = vadd.f32 %v2842, %v3026
    %v3028 = vpop.f32.mrf.mxu0
    %3029 = vmatprep.mubr.bf16.mxu0 0
    %3030 = vmatmul.mubr.bf16.gmra.mxu0 %v2560
    %v3031 = vpop.f32.mrf.mxu0
    %v3032 = vadd.f32 %v2847, %v3031
    %v3033 = vpop.f32.mrf.mxu0
    %v3034 = vpop.f32.mrf.mxu0
    %v3035 = vadd.f32 %v2850, %v3034
    %v3036 = vpop.f32.mrf.mxu0
    %3037 = vmatprep.mubr.bf16.mxu0 0
    %3038 = vmatmul.mubr.bf16.gmra.mxu0 %v2563
    %v3039 = vpop.f32.mrf.mxu0
    %v3040 = vadd.f32 %v2855, %v3039
    %v3041 = vpop.f32.mrf.mxu0
    %v3042 = vpop.f32.mrf.mxu0
    %v3043 = vadd.f32 %v2858, %v3042
    %v3044 = vpop.f32.mrf.mxu0
    %3045 = vmatprep.mubr.bf16.mxu0 0
    %3046 = vmatmul.mubr.bf16.gmra.mxu0 %v2566
    %v3047 = vpop.f32.mrf.mxu0
    %v3048 = vadd.f32 %v2863, %v3047
    %v3049 = vpop.f32.mrf.mxu0
    %v3050 = vpop.f32.mrf.mxu0
    %v3051 = vadd.f32 %v2866, %v3050
    %v3052 = vpop.f32.mrf.mxu0
    %3053 = vmatprep.mubr.bf16.mxu0 0
    %3054 = vmatmul.mubr.bf16.gmra.mxu0 %v2569
    %v3055 = vpop.f32.mrf.mxu0
    %v3056 = vadd.f32 %v2871, %v3055
    %v3057 = vpop.f32.mrf.mxu0
    %v3058 = vpop.f32.mrf.mxu0
    %v3059 = vadd.f32 %v2874, %v3058
    %v3060 = vpop.f32.mrf.mxu0
    %3061 = vmatprep.mubr.bf16.mxu0 0
    %3062 = vmatmul.mubr.bf16.gmra.mxu0 %v2572
    %v3063 = vpop.f32.mrf.mxu0
    %v3064 = vadd.f32 %v2879, %v3063
    %v3065 = vpop.f32.mrf.mxu0
    %v3066 = vpop.f32.mrf.mxu0
    %v3067 = vadd.f32 %v2882, %v3066
    %v3068 = vpop.f32.mrf.mxu0
    %3069 = vmatprep.mubr.bf16.mxu0 0
    %3070 = vmatmul.mubr.bf16.gmra.mxu0 %v2575
    %v3071 = vpop.f32.mrf.mxu0
    %v3072 = vadd.f32 %v2887, %v3071
    %v3073 = vpop.f32.mrf.mxu0
    %v3074 = vpop.f32.mrf.mxu0
    %v3075 = vadd.f32 %v2890, %v3074
    %v3076 = vpop.f32.mrf.mxu0
    %3077 = vmatprep.mubr.bf16.mxu0 0
    %3078 = vmatmul.mubr.bf16.gmra.mxu0 %v2578
    %v3079 = vpop.f32.mrf.mxu0
    %v3080 = vadd.f32 %v2895, %v3079
    %v3081 = vpop.f32.mrf.mxu0
    %v3082 = vpop.f32.mrf.mxu0
    %v3083 = vadd.f32 %v2898, %v3082
    %v3084 = vpop.f32.mrf.mxu0
    %3085 = vmatprep.mubr.bf16.mxu0 0
    %3086 = vmatmul.mubr.bf16.gmra.mxu0 %v2581
    %v3087 = vpop.f32.mrf.mxu0
    %v3088 = vadd.f32 %v2903, %v3087
    %v3089 = vpop.f32.mrf.mxu0
    %v3090 = vpop.f32.mrf.mxu0
    %v3091 = vadd.f32 %v2906, %v3090
    %v3092 = vpop.f32.mrf.mxu0
    %3093 = vmatprep.mubr.bf16.mxu0 0
    %3094 = vmatmul.mubr.bf16.gmra.mxu0 %v2584
    %v3095 = vpop.f32.mrf.mxu0
    %v3096 = vadd.f32 %v2911, %v3095
    %v3097 = vpop.f32.mrf.mxu0
    %v3098 = vpop.f32.mrf.mxu0
    %v3099 = vadd.f32 %v2914, %v3098
    %v3100 = vpop.f32.mrf.mxu0
    %3101 = vmatprep.mubr.bf16.mxu0 0
    %3102 = vmatmul.mubr.bf16.gmra.mxu0 %v2587
    %v3103 = vpop.f32.mrf.mxu0
    %v3104 = vadd.f32 %v2919, %v3103
    %v3105 = vpop.f32.mrf.mxu0
    %v3106 = vpop.f32.mrf.mxu0
    %v3107 = vadd.f32 %v2922, %v3106
    %v3108 = vpop.f32.mrf.mxu0
    %3109 = vmatprep.mubr.bf16.mxu0 0
    %3110 = vmatmul.mubr.bf16.gmra.mxu0 %v2590
    %v3111 = vpop.f32.mrf.mxu0
    %v3112 = vadd.f32 %v2927, %v3111
    %v3113 = vpop.f32.mrf.mxu0
    %v3114 = vpop.f32.mrf.mxu0
    %v3115 = vadd.f32 %v2930, %v3114
    %v3116 = vpop.f32.mrf.mxu0
    %3117 = vmatprep.mubr.bf16.mxu0 0
    %3118 = vmatmul.mubr.bf16.gmra.mxu0 %v2593
    %v3119 = vpop.f32.mrf.mxu0
    %v3120 = vadd.f32 %v2935, %v3119
    %v3121 = vpop.f32.mrf.mxu0
    %v3122 = vpop.f32.mrf.mxu0
    %v3123 = vadd.f32 %v2938, %v3122
    %v3124 = vpop.f32.mrf.mxu0
    %3125 = vmatprep.mubr.bf16.mxu0 0
    %3126 = vmatmul.mubr.bf16.gmra.mxu0 %v2596
    %v3127 = vpop.f32.mrf.mxu0
    %v3128 = vadd.f32 %v2943, %v3127
    %v3129 = vpop.f32.mrf.mxu0
    %v3130 = vpop.f32.mrf.mxu0
    %v3131 = vadd.f32 %v2946, %v3130
    %v3132 = vpop.f32.mrf.mxu0
    %3133 = vmatprep.mubr.bf16.mxu0 0
    %3134 = vmatmul.mubr.bf16.gmra.mxu0 %v2599
    %v3135 = vpop.f32.mrf.mxu0
    %v3136 = vadd.f32 %v2951, %v3135
    %v3137 = vpop.f32.mrf.mxu0
    %v3138 = vpop.f32.mrf.mxu0
    %v3139 = vadd.f32 %v2954, %v3138
    %v3140 = vpop.f32.mrf.mxu0
    %3141 = vmatprep.mubr.bf16.mxu0 0
    %3142 = vmatmul.mubr.bf16.gmra.mxu0 %v2602
    %v3143 = vpop.f32.mrf.mxu0
    %v3144 = vadd.f32 %v2959, %v3143
    %v3145 = vpop.f32.mrf.mxu0
    %v3146 = vpop.f32.mrf.mxu0
    %v3147 = vadd.f32 %v2962, %v3146
    %v3148 = vpop.f32.mrf.mxu0
    %3149 = vmatprep.mubr.bf16.mxu0 0
    %3150 = vmatmul.mubr.bf16.gmra.mxu0 %v2605
    %v3151 = vpop.f32.mrf.mxu0
    %v3152 = vadd.f32 %v2967, %v3151
    %v3153 = vpop.f32.mrf.mxu0
    %v3154 = vpop.f32.mrf.mxu0
    %v3155 = vadd.f32 %v2970, %v3154
    %v3156 = vpop.f32.mrf.mxu0
    %3157 = vmatprep.mubr.bf16.mxu0 0
    %3158 = vmatmul.mubr.bf16.gmra.mxu0 %v2608
    %v3159 = vpop.f32.mrf.mxu0
    %v3160 = vadd.f32 %v2975, %v3159
    %v3161 = vpop.f32.mrf.mxu0
    %v3162 = vpop.f32.mrf.mxu0
    %v3163 = vadd.f32 %v2978, %v3162
    %v3164 = vpop.f32.mrf.mxu0
    %3165 = vmatprep.mubr.bf16.mxu0 0
    %3166 = vmatmul.mubr.bf16.gmra.mxu0 %v2611
    %v3167 = vpop.f32.mrf.mxu0
    %v3168 = vadd.f32 %v2983, %v3167
    %v3169 = vpop.f32.mrf.mxu0
    %v3170 = vpop.f32.mrf.mxu0
    %v3171 = vadd.f32 %v2986, %v3170
    %v3172 = vpop.f32.mrf.mxu0
    %3173 = vdwg.mxu0
    %v3174 = vtanh.pop %v3024
    %v3175 = vtanh.pop %v3027
    %v3176 = vtanh.pop %v3032
    %v3177 = vtanh.pop %v3035
    %v3178 = vtanh.pop %v3040
    %v3179 = vtanh.pop %v3043
    %v3180 = vtanh.pop %v3048
    %v3181 = vtanh.pop %v3051
    %v3182 = vtanh.pop %v3056
    %v3183 = vtanh.pop %v3059
    %v3184 = vtanh.pop %v3064
    %v3185 = vtanh.pop %v3067
    %v3186 = vtanh.pop %v3072
    %v3187 = vtanh.pop %v3075
    %v3188 = vtanh.pop %v3080
    %v3189 = vtanh.pop %v3083
    %v3190 = vtanh.pop %v3088
    %v3191 = vtanh.pop %v3091
    %v3192 = vtanh.pop %v3096
    %v3193 = vtanh.pop %v3099
    %v3194 = vtanh.pop %v3104
    %v3195 = vtanh.pop %v3107
    %v3196 = vtanh.pop %v3112
    %v3197 = vtanh.pop %v3115
    %v3198 = vtanh.pop %v3120
    %v3199 = vtanh.pop %v3123
    %v3200 = vtanh.pop %v3128
    %v3201 = vtanh.pop %v3131
    %v3202 = vtanh.pop %v3136
    %v3203 = vtanh.pop %v3139
    %v3204 = vtanh.pop %v3144
    %v3205 = vtanh.pop %v3147
    %v3206 = vtanh.pop %v3152
    %v3207 = vtanh.pop %v3155
    %v3208 = vtanh.pop %v3160
    %v3209 = vtanh.pop %v3163
    %v3210 = vtanh.pop %v3168
    %v3211 = vtanh.pop %v3171
    %v3212 = vpack.c.bf16 %v3175, %v3174
    %v3213 = vpack.c.bf16 %v3177, %v3176
    %v3214 = vpack.c.bf16 %v3179, %v3178
    %v3215 = vpack.c.bf16 %v3181, %v3180
    %v3216 = vpack.c.bf16 %v3183, %v3182
    %v3217 = vpack.c.bf16 %v3185, %v3184
    %v3218 = vpack.c.bf16 %v3187, %v3186
    %v3219 = vpack.c.bf16 %v3189, %v3188
    %v3220 = vpack.c.bf16 %v3191, %v3190
    %v3221 = vpack.c.bf16 %v3193, %v3192
    %v3222 = vpack.c.bf16 %v3195, %v3194
    %v3223 = vpack.c.bf16 %v3197, %v3196
    %v3224 = vpack.c.bf16 %v3199, %v3198
    %v3225 = vpack.c.bf16 %v3201, %v3200
    %v3226 = vpack.c.bf16 %v3203, %v3202
    %v3227 = vpack.c.bf16 %v3205, %v3204
    %v3228 = vpack.c.bf16 %v3207, %v3206
    %v3229 = vpack.c.bf16 %v3209, %v3208
    %v3230 = vpack.c.bf16 %v3211, %v3210
    %v3250 = vunpack.c.l.b16 %v3212
    %v3251 = vunpack.c.h.b16 %v3212
    %v3252 = vunpack.c.l.b16 %v3213
    %v3253 = vunpack.c.h.b16 %v3213
    %v3254 = vunpack.c.l.b16 %v3214
    %v3255 = vunpack.c.h.b16 %v3214
    %v3256 = vunpack.c.l.b16 %v3215
    %v3257 = vunpack.c.h.b16 %v3215
    %v3258 = vunpack.c.l.b16 %v3216
    %v3259 = vunpack.c.h.b16 %v3216
    %v3260 = vunpack.c.l.b16 %v3217
    %v3261 = vunpack.c.h.b16 %v3217
    %v3262 = vunpack.c.l.b16 %v3218
    %v3263 = vunpack.c.h.b16 %v3218
    %v3264 = vunpack.c.l.b16 %v3219
    %v3265 = vunpack.c.h.b16 %v3219
    %v3266 = vunpack.c.l.b16 %v3220
    %v3267 = vunpack.c.h.b16 %v3220
    %v3268 = vunpack.c.l.b16 %v3221
    %v3269 = vunpack.c.h.b16 %v3221
    %v3270 = vunpack.c.l.b16 %v3222
    %v3271 = vunpack.c.h.b16 %v3222
    %v3272 = vunpack.c.l.b16 %v3223
    %v3273 = vunpack.c.h.b16 %v3223
    %v3274 = vunpack.c.l.b16 %v3224
    %v3275 = vunpack.c.h.b16 %v3224
    %v3276 = vunpack.c.l.b16 %v3225
    %v3277 = vunpack.c.h.b16 %v3225
    %v3278 = vunpack.c.l.b16 %v3226
    %v3279 = vunpack.c.h.b16 %v3226
    %v3280 = vunpack.c.l.b16 %v3227
    %v3281 = vunpack.c.h.b16 %v3227
    %v3282 = vunpack.c.l.b16 %v3228
    %v3283 = vunpack.c.h.b16 %v3228
    %v3284 = vunpack.c.l.b16 %v3229
    %v3285 = vunpack.c.h.b16 %v3229
    %v3286 = vunpack.c.l.b16 %v3230
    %v3287 = vunpack.c.h.b16 %v3230
    %v3288 = vpack.c.b16 %v3250, %v3250
    %v3289 = vpack.c.b16 %v3251, %v3251
    %v3290 = vpack.c.b16 %v3252, %v3252
    %v3291 = vpack.c.b16 %v3253, %v3253
    %v3292 = vpack.c.b16 %v3254, %v3254
    %v3293 = vpack.c.b16 %v3255, %v3255
    %v3294 = vpack.c.b16 %v3256, %v3256
    %v3295 = vpack.c.b16 %v3257, %v3257
    %v3296 = vpack.c.b16 %v3258, %v3258
    %v3297 = vpack.c.b16 %v3259, %v3259
    %v3298 = vpack.c.b16 %v3260, %v3260
    %v3299 = vpack.c.b16 %v3261, %v3261
    %v3300 = vpack.c.b16 %v3262, %v3262
    %v3301 = vpack.c.b16 %v3263, %v3263
    %v3302 = vpack.c.b16 %v3264, %v3264
    %v3303 = vpack.c.b16 %v3265, %v3265
    %v3304 = vpack.c.b16 %v3266, %v3266
    %v3305 = vpack.c.b16 %v3267, %v3267
    %v3306 = vpack.c.b16 %v3268, %v3268
    %v3307 = vpack.c.b16 %v3269, %v3269
    %v3308 = vpack.c.b16 %v3270, %v3270
    %v3309 = vpack.c.b16 %v3271, %v3271
    %v3310 = vpack.c.b16 %v3272, %v3272
    %v3311 = vpack.c.b16 %v3273, %v3273
    %v3312 = vpack.c.b16 %v3274, %v3274
    %v3313 = vpack.c.b16 %v3275, %v3275
    %v3314 = vpack.c.b16 %v3276, %v3276
    %v3315 = vpack.c.b16 %v3277, %v3277
    %v3316 = vpack.c.b16 %v3278, %v3278
    %v3317 = vpack.c.b16 %v3279, %v3279
    %v3318 = vpack.c.b16 %v3280, %v3280
    %v3319 = vpack.c.b16 %v3281, %v3281
    %v3320 = vpack.c.b16 %v3282, %v3282
    %v3321 = vpack.c.b16 %v3283, %v3283
    %v3322 = vpack.c.b16 %v3284, %v3284
    %v3323 = vpack.c.b16 %v3285, %v3285
    %v3324 = vpack.c.b16 %v3286, %v3286
    %v3325 = vpack.c.b16 %v3287, %v3287
    %3364 = vst [vmem:[#allocation7] sm:$0xf] %v3288
    %3365 = vst [vmem:[#allocation7 + $0x4] sm:$0xf] %v3289
    %3366 = vst [vmem:[#allocation7 + $0x8] sm:$0xf] %v3290
    %3367 = vst [vmem:[#allocation7 + $0xc] sm:$0xf] %v3291
    %3368 = vst [vmem:[#allocation7 + $0x10] sm:$0xf] %v3292
    %3369 = vst [vmem:[#allocation7 + $0x14] sm:$0xf] %v3293
    %3370 = vst [vmem:[#allocation7 + $0x18] sm:$0xf] %v3294
    %3371 = vst [vmem:[#allocation7 + $0x1c] sm:$0xf] %v3295
    %3372 = vst [vmem:[#allocation7 + $0x20] sm:$0xf] %v3296
    %3373 = vst [vmem:[#allocation7 + $0x24] sm:$0xf] %v3297
    %3374 = vst [vmem:[#allocation7 + $0x28] sm:$0xf] %v3298
    %3375 = vst [vmem:[#allocation7 + $0x2c] sm:$0xf] %v3299
    %3376 = vst [vmem:[#allocation7 + $0x30] sm:$0xf] %v3300
    %3377 = vst [vmem:[#allocation7 + $0x34] sm:$0xf] %v3301
    %3378 = vst [vmem:[#allocation7 + $0x38] sm:$0xf] %v3302
    %3379 = vst [vmem:[#allocation7 + $0x3c] sm:$0xf] %v3303
    %3380 = vst [vmem:[#allocation7 + $0x40] sm:$0xf] %v3304
    %3381 = vst [vmem:[#allocation7 + $0x44] sm:$0xf] %v3305
    %3382 = vst [vmem:[#allocation7 + $0x48] sm:$0xf] %v3306
    %3383 = vst [vmem:[#allocation7 + $0x4c] sm:$0xf] %v3307
    %3384 = vst [vmem:[#allocation7 + $0x50] sm:$0xf] %v3308
    %3385 = vst [vmem:[#allocation7 + $0x54] sm:$0xf] %v3309
    %3386 = vst [vmem:[#allocation7 + $0x58] sm:$0xf] %v3310
    %3387 = vst [vmem:[#allocation7 + $0x5c] sm:$0xf] %v3311
    %3388 = vst [vmem:[#allocation7 + $0x60] sm:$0xf] %v3312
    %3389 = vst [vmem:[#allocation7 + $0x64] sm:$0xf] %v3313
    %3390 = vst [vmem:[#allocation7 + $0x68] sm:$0xf] %v3314
    %3391 = vst [vmem:[#allocation7 + $0x6c] sm:$0xf] %v3315
    %3392 = vst [vmem:[#allocation7 + $0x70] sm:$0xf] %v3316
    %3393 = vst [vmem:[#allocation7 + $0x74] sm:$0xf] %v3317
    %3394 = vst [vmem:[#allocation7 + $0x78] sm:$0xf] %v3318
    %3395 = vst [vmem:[#allocation7 + $0x7c] sm:$0xf] %v3319
    %3396 = vst [vmem:[#allocation7 + $0x80] sm:$0xf] %v3320
    %3397 = vst [vmem:[#allocation7 + $0x84] sm:$0xf] %v3321
    %3398 = vst [vmem:[#allocation7 + $0x88] sm:$0xf] %v3322
    %3399 = vst [vmem:[#allocation7 + $0x8c] sm:$0xf] %v3323
    %3400 = vst [vmem:[#allocation7 + $0x90] sm:$0xf] %v3324
    %3401 = vst [vmem:[#allocation7 + $0x94] sm:$0xf] %v3325
    // Predicated region
    $region30: #{tpu_custom_call.1} parent=1 // pred_check
      _
    $region31: #{tpu_custom_call.1} parent=1 // pred_check_branch
      %3403 = sbr.rel (0) target = $region33
    $region32: #{tpu_custom_call.1} parent=1 // pred_region
      %s3405 = ssub.s32 2432, 2432
      %3406 = vsyncadd [#allocation4], %s3405
      %s3407 = sshll.u32 [#allocation7], 4
      %s3408 = int_to_ptr.vmem [resolvable:$true] %s3407
      %3413 = dma.vmem_to_hbm [thread:$0]  %s3408, 2432, %s5, [#allocation4], 64, 64, 4
    $region33: #{tpu_custom_call.1} parent=1 // pred_fallthru
      _
    // Predicated region
    $region34: #{tpu_custom_call.1} parent=1 // pred_check
      _
    $region35: #{tpu_custom_call.1} parent=1 // pred_check_branch
      %3415 = sbr.rel (0) target = $region37
    $region36: #{tpu_custom_call.1} parent=1 // pred_region
      %3416 = dma.done [#allocation4], 2432
    $region37: #{tpu_custom_call.1} parent=1 // pred_fallthru
      _
    %3417 = vsyncpa [#allocation3], 1
    %3418 = vsyncpa [#allocation6], 1
    %3419 = vsyncpa [#allocation4], 1

</llo_original>
